<compile_context>
chip_gen: v5e
topology: v5e:2x2
jax: 0.10.0
libtpu: 0.0.40
codegen_flags: <defaults>
</compile_context>

<pallas_src>
import functools
import math

import jax
import jax.numpy as jnp
from jax import lax
from jax.experimental import pallas as pl
from jax.experimental.pallas import tpu as pltpu


def _layernorm(x, gamma, beta, eps=1e-5):
    mu = jnp.mean(x, axis=-1, keepdims=True)
    var = jnp.mean((x - mu) ** 2, axis=-1, keepdims=True)
    return (x - mu) * lax.rsqrt(var + eps) * gamma + beta


def _gelu_exact(x):
    # nn.GELU() default is the exact (erf) form.
    return 0.5 * x * (1.0 + lax.erf(x * (1.0 / math.sqrt(2.0))))


def _gelu_tanh(x):
    c = math.sqrt(2.0 / math.pi)
    return 0.5 * x * (1.0 + jnp.tanh(c * (x + 0.044715 * x * x * x)))


def decoder_block_kernel(
    tgt_ref, enc_ref, mask_ref,
    sa_wqkv_ref, sa_bqkv_ref, sa_wo_ref, sa_bo_ref,
    ca_wq_ref, ca_bq_ref, ca_wkv_ref, ca_bkv_ref, ca_wo_ref, ca_bo_ref,
    w1_ref, b1_ref, w2_ref, b2_ref,
    g1_ref, be1_ref, g2_ref, be2_ref, g3_ref, be3_ref,
    out_ref,
    *, nhead, approx_gelu,
):
    tgt = tgt_ref[...]                       # (Bt, Tq, D) f32
    enc = enc_ref[...]                       # (Bt, Tk, D) f32
    Bt, Tq, D = tgt.shape
    Tk = enc.shape[1]
    H = nhead
    dh = D // H
    scale = 1.0 / math.sqrt(dh)
    mask = mask_ref[...]                     # (Tq, Tq) additive float

    def attention(q3, k3, v3, wo_ref, bo_ref, add_mask, tq):
        """q3:(Bt,tq,D), k3/v3:(Bt,tk,D) -> (Bt*tq, D) already out-projected."""
        wo = wo_ref[...]                     # (D, D), pre-transposed (x @ Wo^T form)
        acc = jnp.zeros((Bt * tq, D), jnp.float32)
        for h in range(H):                   # static unroll; dots batched over Bt
            sl = slice(h * dh, (h + 1) * dh)
            s = jnp.einsum('bqd,bkd->bqk', q3[..., sl], k3[..., sl],
                           preferred_element_type=jnp.float32) * scale
            if add_mask is not None:
                s = s + add_mask
            s = s - jnp.max(s, axis=-1, keepdims=True)
            p = jnp.exp(s)
            p = p * pl.reciprocal(jnp.sum(p, axis=-1, keepdims=True), approx=True)
            oh = jnp.einsum('bqk,bkd->bqd', p, v3[..., sl],
                            preferred_element_type=jnp.float32)       # (Bt, tq, dh)
            acc = acc + jnp.dot(oh.reshape(Bt * tq, dh), wo[sl, :],
                                preferred_element_type=jnp.float32)
        return acc + bo_ref[0]

    # ---------------- self attention + residual + norm1 (dropout1 = id) ----------------
    x2 = tgt.reshape(Bt * Tq, D)
    qkv = jnp.dot(x2, sa_wqkv_ref[...], preferred_element_type=jnp.float32) + sa_bqkv_ref[0]
    q = qkv[:, 0 * D:1 * D].reshape(Bt, Tq, D)
    k = qkv[:, 1 * D:2 * D].reshape(Bt, Tq, D)
    v = qkv[:, 2 * D:3 * D].reshape(Bt, Tq, D)
    t2 = attention(q, k, v, sa_wo_ref, sa_bo_ref, mask, Tq)
    t = _layernorm(x2 + t2, g1_ref[0], be1_ref[0])           # (Bt*Tq, D)

    # ---------------- cross attention + residual + norm2 (dropout2 = id) ----------------
    e2 = enc.reshape(Bt * Tk, D)
    q = (jnp.dot(t, ca_wq_ref[...], preferred_element_type=jnp.float32)
         + ca_bq_ref[0]).reshape(Bt, Tq, D)
    kv = jnp.dot(e2, ca_wkv_ref[...], preferred_element_type=jnp.float32) + ca_bkv_ref[0]
    k = kv[:, 0 * D:1 * D].reshape(Bt, Tk, D)
    v = kv[:, 1 * D:2 * D].reshape(Bt, Tk, D)
    t2 = attention(q, k, v, ca_wo_ref, ca_bo_ref, None, Tq)
    t = _layernorm(t + t2, g2_ref[0], be2_ref[0])

    # ---------------- FFN: linear1 -> GELU -> (dropout=id) -> linear2 ----------------
    hid = jnp.dot(t, w1_ref[...], preferred_element_type=jnp.float32) + b1_ref[0]
    hid = _gelu_tanh(hid) if approx_gelu else _gelu_exact(hid)
    t2 = jnp.dot(hid, w2_ref[...], preferred_element_type=jnp.float32) + b2_ref[0]
    t = _layernorm(t + t2, g3_ref[0], be3_ref[0])

    out_ref[...] = t.reshape(Bt, Tq, D).astype(out_ref.dtype)


def _pick_block_b(B):
    # Block batch to amortize per-step overhead, but keep >= 2 grid steps so
    # the "parallel" axis can still be split across TensorCores (v7x megacore).
    for bb in (8, 4, 2, 1):
        if B % bb == 0 and B // bb >= 2:
            return bb
    return 1


def decoder_block(tgt, enc_out, params, nhead, tgt_mask=None, block_b=None,
                  approx_gelu=False):
    """tgt: (B, Tq, D), enc_out: (B, Tk, D). Returns (B, Tq, D)."""
    B, Tq, D = tgt.shape
    _, Tk, _ = enc_out.shape
    F = params["w1"].shape[0]

    if block_b is None:
        block_b = _pick_block_b(B)
    assert B % block_b == 0

    if tgt_mask is None:
        mask = jnp.zeros((Tq, Tq), jnp.float32)
    elif tgt_mask.dtype == jnp.bool_:
        # PyTorch bool attn_mask: True = disallowed -> large negative additive.
        mask = jnp.where(tgt_mask, jnp.float32(-1e30), jnp.float32(0.0))
    else:
        mask = tgt_mask.astype(jnp.float32)

    f32 = lambda x: jnp.asarray(x, jnp.float32)
    sa_in_w = f32(params["sa_in_w"])
    sa_in_b = f32(params["sa_in_b"]).reshape(1, 3 * D)
    ca_in_w = f32(params["ca_in_w"])
    ca_in_b = f32(params["ca_in_b"]).reshape(1, 3 * D)

    # Pre-transpose every weight once on the host/XLA side -> kernel does x @ W.
    weights = [
        sa_in_w.T,                          # (D, 3D) fused QKV
        sa_in_b,                            # (1, 3D)
        f32(params["sa_out_w"]).T,          # (D, D)
        f32(params["sa_out_b"]).reshape(1, D),
        ca_in_w[:D, :].T,                   # (D, D)  Wq^T
        ca_in_b[:, :D],                     # (1, D)
        ca_in_w[D:, :].T,                   # (D, 2D) Wkv^T
        ca_in_b[:, D:],                     # (1, 2D)
        f32(params["ca_out_w"]).T,          # (D, D)
        f32(params["ca_out_b"]).reshape(1, D),
        f32(params["w1"]).T,                # (D, F)
        f32(params["b1"]).reshape(1, F),
        f32(params["w2"]).T,                # (F, D)
        f32(params["b2"]).reshape(1, D),
        f32(params["g1"]).reshape(1, D), f32(params["be1"]).reshape(1, D),
        f32(params["g2"]).reshape(1, D), f32(params["be2"]).reshape(1, D),
        f32(params["g3"]).reshape(1, D), f32(params["be3"]).reshape(1, D),
    ]

    def const_spec(x):
        nd = x.ndim
        return pl.BlockSpec(x.shape, lambda b, _nd=nd: (0,) * _nd)

    grid_spec = pltpu.PrefetchScalarGridSpec(
        num_scalar_prefetch=0,
        grid=(B // block_b,),
        in_specs=[
            pl.BlockSpec((block_b, Tq, D), lambda b: (b, 0, 0)),   # tgt block
            pl.BlockSpec((block_b, Tk, D), lambda b: (b, 0, 0)),   # enc block
            const_spec(mask),                                      # additive mask
        ] + [const_spec(w) for w in weights],
        out_specs=pl.BlockSpec((block_b, Tq, D), lambda b: (b, 0, 0)),
    )

    kernel = functools.partial(decoder_block_kernel, nhead=nhead,
                               approx_gelu=approx_gelu)
    return pl.pallas_call(
        kernel,
        out_shape=jax.ShapeDtypeStruct((B, Tq, D), jnp.float32),
        grid_spec=grid_spec,
        compiler_params=pltpu.CompilerParams(
            dimension_semantics=("parallel",),
            vmem_limit_bytes=64 * 1024 * 1024,
        ),
    )(tgt.astype(jnp.float32), enc_out.astype(jnp.float32), mask, *weights)


# ----------------------------- reference (plain JAX) -----------------------------
def _ref_mha(q_in, kv_in, w_in, b_in, w_out, b_out, nhead, mask=None):
    D = q_in.shape[-1]
    dh = D // nhead
    qkv_w = jnp.split(w_in, 3, axis=0)
    qkv_b = jnp.split(b_in.reshape(-1), 3, axis=0)
    q = q_in @ qkv_w[0].T + qkv_b[0]
    k = kv_in @ qkv_w[1].T + qkv_b[1]
    v = kv_in @ qkv_w[2].T + qkv_b[2]
    outs = []
    for h in range(nhead):
        sl = slice(h * dh, (h + 1) * dh)
        s = (q[..., sl] @ k[..., sl].swapaxes(-1, -2)) / math.sqrt(dh)
        if mask is not None:
            s = s + mask
        p = jax.nn.softmax(s, axis=-1)
        outs.append(p @ v[..., sl])
    return jnp.concatenate(outs, axis=-1) @ w_out.T + b_out.reshape(-1)


def decoder_block_ref(tgt, enc, p, nhead, mask=None):
    ln = lambda x, g, b: _layernorm(x, g.reshape(-1), b.reshape(-1))
    t2 = _ref_mha(tgt, tgt, p["sa_in_w"], p["sa_in_b"], p["sa_out_w"], p["sa_out_b"],
                  nhead, mask)
    t = ln(tgt + t2, p["g1"], p["be1"])
    t2 = _ref_mha(t, enc, p["ca_in_w"], p["ca_in_b"], p["ca_out_w"], p["ca_out_b"], nhead)
    t = ln(t + t2, p["g2"], p["be2"])
    h = jax.nn.gelu(t @ p["w1"].T + p["b1"].reshape(-1), approximate=False)
    t2 = h @ p["w2"].T + p["b2"].reshape(-1)
    return ln(t + t2, p["g3"], p["be3"])


# ----------------------------------- main -----------------------------------
if __name__ == "__main__":
    B, Tq, Tk = 2, 8, 8
    hidden_dim, nhead, dim_ff = 32, 4, 64

    key = jax.random.PRNGKey(0)
    ks = jax.random.split(key, 16)
    u = lambda k, shape, s=0.2: jax.random.uniform(k, shape, jnp.float32, -s, s)

    params = {
        # self-attn (PyTorch MultiheadAttention layout: in_proj (3D, D), bias (3D,))
        "sa_in_w": u(ks[0], (3 * hidden_dim, hidden_dim)),
        "sa_in_b": u(ks[1], (1, 3 * hidden_dim)),
        "sa_out_w": u(ks[2], (hidden_dim, hidden_dim)),
        "sa_out_b": u(ks[3], (1, hidden_dim)),
        # cross-attn
        "ca_in_w": u(ks[4], (3 * hidden_dim, hidden_dim)),
        "ca_in_b": u(ks[5], (1, 3 * hidden_dim)),
        "ca_out_w": u(ks[6], (hidden_dim, hidden_dim)),
        "ca_out_b": u(ks[7], (1, hidden_dim)),
        # FFN
        "w1": u(ks[8], (dim_ff, hidden_dim)),
        "b1": u(ks[9], (1, dim_ff)),
        "w2": u(ks[10], (hidden_dim, dim_ff)),
        "b2": u(ks[11], (1, hidden_dim)),
        # layernorms (PyTorch default init: gamma=1, beta=0)
        "g1": jnp.ones((1, hidden_dim), jnp.float32),
        "be1": jnp.zeros((1, hidden_dim), jnp.float32),
        "g2": jnp.ones((1, hidden_dim), jnp.float32),
        "be2": jnp.zeros((1, hidden_dim), jnp.float32),
        "g3": jnp.ones((1, hidden_dim), jnp.float32),
        "be3": jnp.zeros((1, hidden_dim), jnp.float32),
    }

    tgt = jax.random.normal(ks[12], (B, Tq, hidden_dim), jnp.float32)
    enc_out = jax.random.normal(ks[13], (B, Tk, hidden_dim), jnp.float32)

    out = decoder_block(tgt, enc_out, params, nhead, tgt_mask=None)
    out = jax.block_until_ready(out)

    ref = decoder_block_ref(tgt, enc_out, params, nhead)
    assert out.shape == (B, Tq, hidden_dim)
    err = float(jnp.max(jnp.abs(out - ref)))
    assert jnp.allclose(out, ref, atol=2e-3, rtol=2e-3), err

    print("KERNEL_OK")
</pallas_src>

<mosaic_0001>
module attributes {stable_mosaic.version = 11 : i64} {
  func.func @decoder_block_kernel(%arg0: i32, %arg1: memref<1x8x32xf32, #tpu.memory_space<vmem>>, %arg2: memref<1x8x32xf32, #tpu.memory_space<vmem>>, %arg3: memref<8x8xf32, #tpu.memory_space<vmem>>, %arg4: memref<32x96xf32, #tpu.memory_space<vmem>>, %arg5: memref<1x96xf32, #tpu.memory_space<vmem>>, %arg6: memref<32x32xf32, #tpu.memory_space<vmem>>, %arg7: memref<1x32xf32, #tpu.memory_space<vmem>>, %arg8: memref<32x32xf32, #tpu.memory_space<vmem>>, %arg9: memref<1x32xf32, #tpu.memory_space<vmem>>, %arg10: memref<32x64xf32, #tpu.memory_space<vmem>>, %arg11: memref<1x64xf32, #tpu.memory_space<vmem>>, %arg12: memref<32x32xf32, #tpu.memory_space<vmem>>, %arg13: memref<1x32xf32, #tpu.memory_space<vmem>>, %arg14: memref<32x64xf32, #tpu.memory_space<vmem>>, %arg15: memref<1x64xf32, #tpu.memory_space<vmem>>, %arg16: memref<64x32xf32, #tpu.memory_space<vmem>>, %arg17: memref<1x32xf32, #tpu.memory_space<vmem>>, %arg18: memref<1x32xf32, #tpu.memory_space<vmem>>, %arg19: memref<1x32xf32, #tpu.memory_space<vmem>>, %arg20: memref<1x32xf32, #tpu.memory_space<vmem>>, %arg21: memref<1x32xf32, #tpu.memory_space<vmem>>, %arg22: memref<1x32xf32, #tpu.memory_space<vmem>>, %arg23: memref<1x32xf32, #tpu.memory_space<vmem>>, %arg24: memref<1x8x32xf32, #tpu.memory_space<vmem>>) attributes {dimension_semantics = [#tpu.dimension_semantics<parallel>], iteration_bounds = array<i64: 2>, scalar_prefetch = 0 : i64, scratch_operands = 0 : i64, tpu.core_type = #tpu.core_type<tc>, window_params = [{transform_indices = @transform_0, window_bounds = array<i64: 1, 8, 32>}, {transform_indices = @transform_1, window_bounds = array<i64: 1, 8, 32>}, {pipeline_mode = #tpu.pipeline_mode<synchronous>, transform_indices = @transform_2, window_bounds = array<i64: 8, 8>}, {pipeline_mode = #tpu.pipeline_mode<synchronous>, transform_indices = @transform_3, window_bounds = array<i64: 32, 96>}, {pipeline_mode = #tpu.pipeline_mode<synchronous>, transform_indices = @transform_4, window_bounds = array<i64: 1, 96>}, {pipeline_mode = #tpu.pipeline_mode<synchronous>, transform_indices = @transform_5, window_bounds = array<i64: 32, 32>}, {pipeline_mode = #tpu.pipeline_mode<synchronous>, transform_indices = @transform_6, window_bounds = array<i64: 1, 32>}, {pipeline_mode = #tpu.pipeline_mode<synchronous>, transform_indices = @transform_7, window_bounds = array<i64: 32, 32>}, {pipeline_mode = #tpu.pipeline_mode<synchronous>, transform_indices = @transform_8, window_bounds = array<i64: 1, 32>}, {pipeline_mode = #tpu.pipeline_mode<synchronous>, transform_indices = @transform_9, window_bounds = array<i64: 32, 64>}, {pipeline_mode = #tpu.pipeline_mode<synchronous>, transform_indices = @transform_10, window_bounds = array<i64: 1, 64>}, {pipeline_mode = #tpu.pipeline_mode<synchronous>, transform_indices = @transform_11, window_bounds = array<i64: 32, 32>}, {pipeline_mode = #tpu.pipeline_mode<synchronous>, transform_indices = @transform_12, window_bounds = array<i64: 1, 32>}, {pipeline_mode = #tpu.pipeline_mode<synchronous>, transform_indices = @transform_13, window_bounds = array<i64: 32, 64>}, {pipeline_mode = #tpu.pipeline_mode<synchronous>, transform_indices = @transform_14, window_bounds = array<i64: 1, 64>}, {pipeline_mode = #tpu.pipeline_mode<synchronous>, transform_indices = @transform_15, window_bounds = array<i64: 64, 32>}, {pipeline_mode = #tpu.pipeline_mode<synchronous>, transform_indices = @transform_16, window_bounds = array<i64: 1, 32>}, {pipeline_mode = #tpu.pipeline_mode<synchronous>, transform_indices = @transform_17, window_bounds = array<i64: 1, 32>}, {pipeline_mode = #tpu.pipeline_mode<synchronous>, transform_indices = @transform_18, window_bounds = array<i64: 1, 32>}, {pipeline_mode = #tpu.pipeline_mode<synchronous>, transform_indices = @transform_19, window_bounds = array<i64: 1, 32>}, {pipeline_mode = #tpu.pipeline_mode<synchronous>, transform_indices = @transform_20, window_bounds = array<i64: 1, 32>}, {pipeline_mode = #tpu.pipeline_mode<synchronous>, transform_indices = @transform_21, window_bounds = array<i64: 1, 32>}, {pipeline_mode = #tpu.pipeline_mode<synchronous>, transform_indices = @transform_22, window_bounds = array<i64: 1, 32>}, {transform_indices = @transform_23, window_bounds = array<i64: 1, 8, 32>}]} {
    %c0 = arith.constant 0 : index
    %c0_0 = arith.constant 0 : index
    %c0_1 = arith.constant 0 : index
    %0 = vector.load %arg1[%c0, %c0_0, %c0_1] : memref<1x8x32xf32, #tpu.memory_space<vmem>>, vector<1x8x32xf32>
    %c0_2 = arith.constant 0 : index
    %c0_3 = arith.constant 0 : index
    %c0_4 = arith.constant 0 : index
    %1 = vector.load %arg2[%c0_2, %c0_3, %c0_4] : memref<1x8x32xf32, #tpu.memory_space<vmem>>, vector<1x8x32xf32>
    %c0_5 = arith.constant 0 : index
    %c0_6 = arith.constant 0 : index
    %2 = vector.load %arg3[%c0_5, %c0_6] : memref<8x8xf32, #tpu.memory_space<vmem>>, vector<8x8xf32>
    %3 = vector.shape_cast %0 : vector<1x8x32xf32> to vector<8x32xf32>
    %c0_7 = arith.constant 0 : index
    %c0_8 = arith.constant 0 : index
    %4 = vector.load %arg4[%c0_7, %c0_8] : memref<32x96xf32, #tpu.memory_space<vmem>>, vector<32x96xf32>
    %cst = arith.constant dense<0.000000e+00> : vector<8x96xf32>
    %5 = tpu.matmul %3, %4, %cst {dimension_numbers = #tpu.dot_dimension_numbers<[1], [0], [0], [1], [0, 0, 1, 1], [], []>} : vector<8x32xf32>, vector<32x96xf32>, vector<8x96xf32> -> vector<8x96xf32>
    %c0_9 = arith.constant 0 : index
    %c0_10 = arith.constant 0 : index
    %6 = vector.load %arg5[%c0_9, %c0_10] : memref<1x96xf32, #tpu.memory_space<vmem>>, vector<1x96xf32>
    %7 = vector.shape_cast %6 : vector<1x96xf32> to vector<96xf32>
    %8 = vector.shape_cast %7 : vector<96xf32> to vector<1x96xf32>
    %9 = vector.broadcast %8 : vector<1x96xf32> to vector<8x96xf32>
    %10 = arith.addf %5, %9 : vector<8x96xf32>
    %11 = vector.extract_strided_slice %10 {offsets = [0, 0], sizes = [8, 32], strides = [1, 1]} : vector<8x96xf32> to vector<8x32xf32>
    %12 = vector.shape_cast %11 : vector<8x32xf32> to vector<1x8x32xf32>
    %13 = vector.extract_strided_slice %10 {offsets = [0, 32], sizes = [8, 32], strides = [1, 1]} : vector<8x96xf32> to vector<8x32xf32>
    %14 = vector.shape_cast %13 : vector<8x32xf32> to vector<1x8x32xf32>
    %15 = vector.extract_strided_slice %10 {offsets = [0, 64], sizes = [8, 32], strides = [1, 1]} : vector<8x96xf32> to vector<8x32xf32>
    %16 = vector.shape_cast %15 : vector<8x32xf32> to vector<1x8x32xf32>
    %c0_11 = arith.constant 0 : index
    %c0_12 = arith.constant 0 : index
    %17 = vector.load %arg6[%c0_11, %c0_12] : memref<32x32xf32, #tpu.memory_space<vmem>>, vector<32x32xf32>
    %cst_13 = arith.constant 0.000000e+00 : f32
    %18 = vector.broadcast %cst_13 : f32 to vector<8x32xf32>
    %19 = vector.extract_strided_slice %12 {offsets = [0, 0, 0], sizes = [1, 8, 8], strides = [1, 1, 1]} : vector<1x8x32xf32> to vector<1x8x8xf32>
    %20 = vector.extract_strided_slice %14 {offsets = [0, 0, 0], sizes = [1, 8, 8], strides = [1, 1, 1]} : vector<1x8x32xf32> to vector<1x8x8xf32>
    "tpu.trace_start"() <{level = 10 : i32, message = "bqd,bkd->bqk"}> : () -> ()
    %cst_14 = arith.constant dense<0.000000e+00> : vector<1x8x8xf32>
    %21 = tpu.matmul %19, %20, %cst_14 {dimension_numbers = #tpu.dot_dimension_numbers<[2], [2], [1], [1], [0, 0, 0, 1, 1, 1], [0], [0]>} : vector<1x8x8xf32>, vector<1x8x8xf32>, vector<1x8x8xf32> -> vector<1x8x8xf32>
    "tpu.trace_stop"() : () -> ()
    %cst_15 = arith.constant 0.353553385 : f32
    %22 = vector.broadcast %cst_15 : f32 to vector<1x8x8xf32>
    %23 = arith.mulf %21, %22 : vector<1x8x8xf32>
    %24 = vector.shape_cast %2 : vector<8x8xf32> to vector<1x8x8xf32>
    %25 = arith.addf %23, %24 : vector<1x8x8xf32>
    %cst_16 = arith.constant dense<0xFF800000> : vector<1x8xf32>
    %26 = vector.multi_reduction <maximumf>, %25, %cst_16 [2] : vector<1x8x8xf32> to vector<1x8xf32>
    %27 = vector.shape_cast %26 : vector<1x8xf32> to vector<1x8x1xf32>
    %28 = vector.broadcast %27 : vector<1x8x1xf32> to vector<1x8x8xf32>
    %29 = arith.subf %25, %28 : vector<1x8x8xf32>
    %30 = math.exp %29 : vector<1x8x8xf32>
    %cst_17 = arith.constant dense<0.000000e+00> : vector<1x8xf32>
    %31 = vector.multi_reduction <add>, %30, %cst_17 [2] : vector<1x8x8xf32> to vector<1x8xf32>
    %32 = vector.shape_cast %31 : vector<1x8xf32> to vector<1x8x1xf32>
    %33 = tpu.reciprocal %32 {approx = true} : vector<1x8x1xf32> -> vector<1x8x1xf32>
    %34 = vector.broadcast %33 : vector<1x8x1xf32> to vector<1x8x8xf32>
    %35 = arith.mulf %30, %34 : vector<1x8x8xf32>
    %36 = vector.extract_strided_slice %16 {offsets = [0, 0, 0], sizes = [1, 8, 8], strides = [1, 1, 1]} : vector<1x8x32xf32> to vector<1x8x8xf32>
    "tpu.trace_start"() <{level = 10 : i32, message = "bqk,bkd->bqd"}> : () -> ()
    %cst_18 = arith.constant dense<0.000000e+00> : vector<1x8x8xf32>
    %37 = tpu.matmul %35, %36, %cst_18 {dimension_numbers = #tpu.dot_dimension_numbers<[2], [1], [1], [2], [0, 0, 0, 1, 1, 2], [0], [0]>} : vector<1x8x8xf32>, vector<1x8x8xf32>, vector<1x8x8xf32> -> vector<1x8x8xf32>
    "tpu.trace_stop"() : () -> ()
    %38 = vector.shape_cast %37 : vector<1x8x8xf32> to vector<8x8xf32>
    %39 = vector.extract_strided_slice %17 {offsets = [0, 0], sizes = [8, 32], strides = [1, 1]} : vector<32x32xf32> to vector<8x32xf32>
    %cst_19 = arith.constant dense<0.000000e+00> : vector<8x32xf32>
    %40 = tpu.matmul %38, %39, %cst_19 {dimension_numbers = #tpu.dot_dimension_numbers<[1], [0], [0], [1], [0, 0, 1, 1], [], []>} : vector<8x8xf32>, vector<8x32xf32>, vector<8x32xf32> -> vector<8x32xf32>
    %41 = arith.addf %18, %40 : vector<8x32xf32>
    %42 = vector.extract_strided_slice %12 {offsets = [0, 0, 8], sizes = [1, 8, 8], strides = [1, 1, 1]} : vector<1x8x32xf32> to vector<1x8x8xf32>
    %43 = vector.extract_strided_slice %14 {offsets = [0, 0, 8], sizes = [1, 8, 8], strides = [1, 1, 1]} : vector<1x8x32xf32> to vector<1x8x8xf32>
    "tpu.trace_start"() <{level = 10 : i32, message = "bqd,bkd->bqk"}> : () -> ()
    %cst_20 = arith.constant dense<0.000000e+00> : vector<1x8x8xf32>
    %44 = tpu.matmul %42, %43, %cst_20 {dimension_numbers = #tpu.dot_dimension_numbers<[2], [2], [1], [1], [0, 0, 0, 1, 1, 1], [0], [0]>} : vector<1x8x8xf32>, vector<1x8x8xf32>, vector<1x8x8xf32> -> vector<1x8x8xf32>
    "tpu.trace_stop"() : () -> ()
    %cst_21 = arith.constant 0.353553385 : f32
    %45 = vector.broadcast %cst_21 : f32 to vector<1x8x8xf32>
    %46 = arith.mulf %44, %45 : vector<1x8x8xf32>
    %47 = vector.shape_cast %2 : vector<8x8xf32> to vector<1x8x8xf32>
    %48 = arith.addf %46, %47 : vector<1x8x8xf32>
    %cst_22 = arith.constant dense<0xFF800000> : vector<1x8xf32>
    %49 = vector.multi_reduction <maximumf>, %48, %cst_22 [2] : vector<1x8x8xf32> to vector<1x8xf32>
    %50 = vector.shape_cast %49 : vector<1x8xf32> to vector<1x8x1xf32>
    %51 = vector.broadcast %50 : vector<1x8x1xf32> to vector<1x8x8xf32>
    %52 = arith.subf %48, %51 : vector<1x8x8xf32>
    %53 = math.exp %52 : vector<1x8x8xf32>
    %cst_23 = arith.constant dense<0.000000e+00> : vector<1x8xf32>
    %54 = vector.multi_reduction <add>, %53, %cst_23 [2] : vector<1x8x8xf32> to vector<1x8xf32>
    %55 = vector.shape_cast %54 : vector<1x8xf32> to vector<1x8x1xf32>
    %56 = tpu.reciprocal %55 {approx = true} : vector<1x8x1xf32> -> vector<1x8x1xf32>
    %57 = vector.broadcast %56 : vector<1x8x1xf32> to vector<1x8x8xf32>
    %58 = arith.mulf %53, %57 : vector<1x8x8xf32>
    %59 = vector.extract_strided_slice %16 {offsets = [0, 0, 8], sizes = [1, 8, 8], strides = [1, 1, 1]} : vector<1x8x32xf32> to vector<1x8x8xf32>
    "tpu.trace_start"() <{level = 10 : i32, message = "bqk,bkd->bqd"}> : () -> ()
    %cst_24 = arith.constant dense<0.000000e+00> : vector<1x8x8xf32>
    %60 = tpu.matmul %58, %59, %cst_24 {dimension_numbers = #tpu.dot_dimension_numbers<[2], [1], [1], [2], [0, 0, 0, 1, 1, 2], [0], [0]>} : vector<1x8x8xf32>, vector<1x8x8xf32>, vector<1x8x8xf32> -> vector<1x8x8xf32>
    "tpu.trace_stop"() : () -> ()
    %61 = vector.shape_cast %60 : vector<1x8x8xf32> to vector<8x8xf32>
    %62 = vector.extract_strided_slice %17 {offsets = [8, 0], sizes = [8, 32], strides = [1, 1]} : vector<32x32xf32> to vector<8x32xf32>
    %cst_25 = arith.constant dense<0.000000e+00> : vector<8x32xf32>
    %63 = tpu.matmul %61, %62, %cst_25 {dimension_numbers = #tpu.dot_dimension_numbers<[1], [0], [0], [1], [0, 0, 1, 1], [], []>} : vector<8x8xf32>, vector<8x32xf32>, vector<8x32xf32> -> vector<8x32xf32>
    %64 = arith.addf %41, %63 : vector<8x32xf32>
    %65 = vector.extract_strided_slice %12 {offsets = [0, 0, 16], sizes = [1, 8, 8], strides = [1, 1, 1]} : vector<1x8x32xf32> to vector<1x8x8xf32>
    %66 = vector.extract_strided_slice %14 {offsets = [0, 0, 16], sizes = [1, 8, 8], strides = [1, 1, 1]} : vector<1x8x32xf32> to vector<1x8x8xf32>
    "tpu.trace_start"() <{level = 10 : i32, message = "bqd,bkd->bqk"}> : () -> ()
    %cst_26 = arith.constant dense<0.000000e+00> : vector<1x8x8xf32>
    %67 = tpu.matmul %65, %66, %cst_26 {dimension_numbers = #tpu.dot_dimension_numbers<[2], [2], [1], [1], [0, 0, 0, 1, 1, 1], [0], [0]>} : vector<1x8x8xf32>, vector<1x8x8xf32>, vector<1x8x8xf32> -> vector<1x8x8xf32>
    "tpu.trace_stop"() : () -> ()
    %cst_27 = arith.constant 0.353553385 : f32
    %68 = vector.broadcast %cst_27 : f32 to vector<1x8x8xf32>
    %69 = arith.mulf %67, %68 : vector<1x8x8xf32>
    %70 = vector.shape_cast %2 : vector<8x8xf32> to vector<1x8x8xf32>
    %71 = arith.addf %69, %70 : vector<1x8x8xf32>
    %cst_28 = arith.constant dense<0xFF800000> : vector<1x8xf32>
    %72 = vector.multi_reduction <maximumf>, %71, %cst_28 [2] : vector<1x8x8xf32> to vector<1x8xf32>
    %73 = vector.shape_cast %72 : vector<1x8xf32> to vector<1x8x1xf32>
    %74 = vector.broadcast %73 : vector<1x8x1xf32> to vector<1x8x8xf32>
    %75 = arith.subf %71, %74 : vector<1x8x8xf32>
    %76 = math.exp %75 : vector<1x8x8xf32>
    %cst_29 = arith.constant dense<0.000000e+00> : vector<1x8xf32>
    %77 = vector.multi_reduction <add>, %76, %cst_29 [2] : vector<1x8x8xf32> to vector<1x8xf32>
    %78 = vector.shape_cast %77 : vector<1x8xf32> to vector<1x8x1xf32>
    %79 = tpu.reciprocal %78 {approx = true} : vector<1x8x1xf32> -> vector<1x8x1xf32>
    %80 = vector.broadcast %79 : vector<1x8x1xf32> to vector<1x8x8xf32>
    %81 = arith.mulf %76, %80 : vector<1x8x8xf32>
    %82 = vector.extract_strided_slice %16 {offsets = [0, 0, 16], sizes = [1, 8, 8], strides = [1, 1, 1]} : vector<1x8x32xf32> to vector<1x8x8xf32>
    "tpu.trace_start"() <{level = 10 : i32, message = "bqk,bkd->bqd"}> : () -> ()
    %cst_30 = arith.constant dense<0.000000e+00> : vector<1x8x8xf32>
    %83 = tpu.matmul %81, %82, %cst_30 {dimension_numbers = #tpu.dot_dimension_numbers<[2], [1], [1], [2], [0, 0, 0, 1, 1, 2], [0], [0]>} : vector<1x8x8xf32>, vector<1x8x8xf32>, vector<1x8x8xf32> -> vector<1x8x8xf32>
    "tpu.trace_stop"() : () -> ()
    %84 = vector.shape_cast %83 : vector<1x8x8xf32> to vector<8x8xf32>
    %85 = vector.extract_strided_slice %17 {offsets = [16, 0], sizes = [8, 32], strides = [1, 1]} : vector<32x32xf32> to vector<8x32xf32>
    %cst_31 = arith.constant dense<0.000000e+00> : vector<8x32xf32>
    %86 = tpu.matmul %84, %85, %cst_31 {dimension_numbers = #tpu.dot_dimension_numbers<[1], [0], [0], [1], [0, 0, 1, 1], [], []>} : vector<8x8xf32>, vector<8x32xf32>, vector<8x32xf32> -> vector<8x32xf32>
    %87 = arith.addf %64, %86 : vector<8x32xf32>
    %88 = vector.extract_strided_slice %12 {offsets = [0, 0, 24], sizes = [1, 8, 8], strides = [1, 1, 1]} : vector<1x8x32xf32> to vector<1x8x8xf32>
    %89 = vector.extract_strided_slice %14 {offsets = [0, 0, 24], sizes = [1, 8, 8], strides = [1, 1, 1]} : vector<1x8x32xf32> to vector<1x8x8xf32>
    "tpu.trace_start"() <{level = 10 : i32, message = "bqd,bkd->bqk"}> : () -> ()
    %cst_32 = arith.constant dense<0.000000e+00> : vector<1x8x8xf32>
    %90 = tpu.matmul %88, %89, %cst_32 {dimension_numbers = #tpu.dot_dimension_numbers<[2], [2], [1], [1], [0, 0, 0, 1, 1, 1], [0], [0]>} : vector<1x8x8xf32>, vector<1x8x8xf32>, vector<1x8x8xf32> -> vector<1x8x8xf32>
    "tpu.trace_stop"() : () -> ()
    %cst_33 = arith.constant 0.353553385 : f32
    %91 = vector.broadcast %cst_33 : f32 to vector<1x8x8xf32>
    %92 = arith.mulf %90, %91 : vector<1x8x8xf32>
    %93 = vector.shape_cast %2 : vector<8x8xf32> to vector<1x8x8xf32>
    %94 = arith.addf %92, %93 : vector<1x8x8xf32>
    %cst_34 = arith.constant dense<0xFF800000> : vector<1x8xf32>
    %95 = vector.multi_reduction <maximumf>, %94, %cst_34 [2] : vector<1x8x8xf32> to vector<1x8xf32>
    %96 = vector.shape_cast %95 : vector<1x8xf32> to vector<1x8x1xf32>
    %97 = vector.broadcast %96 : vector<1x8x1xf32> to vector<1x8x8xf32>
    %98 = arith.subf %94, %97 : vector<1x8x8xf32>
    %99 = math.exp %98 : vector<1x8x8xf32>
    %cst_35 = arith.constant dense<0.000000e+00> : vector<1x8xf32>
    %100 = vector.multi_reduction <add>, %99, %cst_35 [2] : vector<1x8x8xf32> to vector<1x8xf32>
    %101 = vector.shape_cast %100 : vector<1x8xf32> to vector<1x8x1xf32>
    %102 = tpu.reciprocal %101 {approx = true} : vector<1x8x1xf32> -> vector<1x8x1xf32>
    %103 = vector.broadcast %102 : vector<1x8x1xf32> to vector<1x8x8xf32>
    %104 = arith.mulf %99, %103 : vector<1x8x8xf32>
    %105 = vector.extract_strided_slice %16 {offsets = [0, 0, 24], sizes = [1, 8, 8], strides = [1, 1, 1]} : vector<1x8x32xf32> to vector<1x8x8xf32>
    "tpu.trace_start"() <{level = 10 : i32, message = "bqk,bkd->bqd"}> : () -> ()
    %cst_36 = arith.constant dense<0.000000e+00> : vector<1x8x8xf32>
    %106 = tpu.matmul %104, %105, %cst_36 {dimension_numbers = #tpu.dot_dimension_numbers<[2], [1], [1], [2], [0, 0, 0, 1, 1, 2], [0], [0]>} : vector<1x8x8xf32>, vector<1x8x8xf32>, vector<1x8x8xf32> -> vector<1x8x8xf32>
    "tpu.trace_stop"() : () -> ()
    %107 = vector.shape_cast %106 : vector<1x8x8xf32> to vector<8x8xf32>
    %108 = vector.extract_strided_slice %17 {offsets = [24, 0], sizes = [8, 32], strides = [1, 1]} : vector<32x32xf32> to vector<8x32xf32>
    %cst_37 = arith.constant dense<0.000000e+00> : vector<8x32xf32>
    %109 = tpu.matmul %107, %108, %cst_37 {dimension_numbers = #tpu.dot_dimension_numbers<[1], [0], [0], [1], [0, 0, 1, 1], [], []>} : vector<8x8xf32>, vector<8x32xf32>, vector<8x32xf32> -> vector<8x32xf32>
    %110 = arith.addf %87, %109 : vector<8x32xf32>
    %c0_38 = arith.constant 0 : index
    %c0_39 = arith.constant 0 : index
    %111 = vector.load %arg7[%c0_38, %c0_39] : memref<1x32xf32, #tpu.memory_space<vmem>>, vector<1x32xf32>
    %112 = vector.shape_cast %111 : vector<1x32xf32> to vector<32xf32>
    %113 = vector.shape_cast %112 : vector<32xf32> to vector<1x32xf32>
    %114 = vector.broadcast %113 : vector<1x32xf32> to vector<8x32xf32>
    %115 = arith.addf %110, %114 : vector<8x32xf32>
    %116 = arith.addf %3, %115 : vector<8x32xf32>
    %c0_40 = arith.constant 0 : index
    %c0_41 = arith.constant 0 : index
    %117 = vector.load %arg18[%c0_40, %c0_41] : memref<1x32xf32, #tpu.memory_space<vmem>>, vector<1x32xf32>
    %118 = vector.shape_cast %117 : vector<1x32xf32> to vector<32xf32>
    %c0_42 = arith.constant 0 : index
    %c0_43 = arith.constant 0 : index
    %119 = vector.load %arg19[%c0_42, %c0_43] : memref<1x32xf32, #tpu.memory_space<vmem>>, vector<1x32xf32>
    %120 = vector.shape_cast %119 : vector<1x32xf32> to vector<32xf32>
    %cst_44 = arith.constant dense<0.000000e+00> : vector<8xf32>
    %121 = vector.multi_reduction <add>, %116, %cst_44 [1] : vector<8x32xf32> to vector<8xf32>
    %122 = vector.shape_cast %121 : vector<8xf32> to vector<8x1xf32>
    %cst_45 = arith.constant 3.200000e+01 : f32
    %123 = vector.broadcast %cst_45 : f32 to vector<8x1xf32>
    %124 = arith.divf %122, %123 : vector<8x1xf32>
    %125 = vector.broadcast %124 : vector<8x1xf32> to vector<8x32xf32>
    %126 = arith.subf %116, %125 : vector<8x32xf32>
    %127 = arith.mulf %126, %126 : vector<8x32xf32>
    %cst_46 = arith.constant dense<0.000000e+00> : vector<8xf32>
    %128 = vector.multi_reduction <add>, %127, %cst_46 [1] : vector<8x32xf32> to vector<8xf32>
    %129 = vector.shape_cast %128 : vector<8xf32> to vector<8x1xf32>
    %cst_47 = arith.constant 3.200000e+01 : f32
    %130 = vector.broadcast %cst_47 : f32 to vector<8x1xf32>
    %131 = arith.divf %129, %130 : vector<8x1xf32>
    %132 = vector.broadcast %124 : vector<8x1xf32> to vector<8x32xf32>
    %133 = arith.subf %116, %132 : vector<8x32xf32>
    %cst_48 = arith.constant 9.99999974E-6 : f32
    %134 = vector.broadcast %cst_48 : f32 to vector<8x1xf32>
    %135 = arith.addf %131, %134 : vector<8x1xf32>
    %136 = math.rsqrt %135 : vector<8x1xf32>
    %137 = vector.broadcast %136 : vector<8x1xf32> to vector<8x32xf32>
    %138 = arith.mulf %133, %137 : vector<8x32xf32>
    %139 = vector.shape_cast %118 : vector<32xf32> to vector<1x32xf32>
    %140 = vector.broadcast %139 : vector<1x32xf32> to vector<8x32xf32>
    %141 = arith.mulf %138, %140 : vector<8x32xf32>
    %142 = vector.shape_cast %120 : vector<32xf32> to vector<1x32xf32>
    %143 = vector.broadcast %142 : vector<1x32xf32> to vector<8x32xf32>
    %144 = arith.addf %141, %143 : vector<8x32xf32>
    %145 = vector.shape_cast %1 : vector<1x8x32xf32> to vector<8x32xf32>
    %c0_49 = arith.constant 0 : index
    %c0_50 = arith.constant 0 : index
    %146 = vector.load %arg8[%c0_49, %c0_50] : memref<32x32xf32, #tpu.memory_space<vmem>>, vector<32x32xf32>
    %cst_51 = arith.constant dense<0.000000e+00> : vector<8x32xf32>
    %147 = tpu.matmul %144, %146, %cst_51 {dimension_numbers = #tpu.dot_dimension_numbers<[1], [0], [0], [1], [0, 0, 1, 1], [], []>} : vector<8x32xf32>, vector<32x32xf32>, vector<8x32xf32> -> vector<8x32xf32>
    %c0_52 = arith.constant 0 : index
    %c0_53 = arith.constant 0 : index
    %148 = vector.load %arg9[%c0_52, %c0_53] : memref<1x32xf32, #tpu.memory_space<vmem>>, vector<1x32xf32>
    %149 = vector.shape_cast %148 : vector<1x32xf32> to vector<32xf32>
    %150 = vector.shape_cast %149 : vector<32xf32> to vector<1x32xf32>
    %151 = vector.broadcast %150 : vector<1x32xf32> to vector<8x32xf32>
    %152 = arith.addf %147, %151 : vector<8x32xf32>
    %153 = vector.shape_cast %152 : vector<8x32xf32> to vector<1x8x32xf32>
    %c0_54 = arith.constant 0 : index
    %c0_55 = arith.constant 0 : index
    %154 = vector.load %arg10[%c0_54, %c0_55] : memref<32x64xf32, #tpu.memory_space<vmem>>, vector<32x64xf32>
    %cst_56 = arith.constant dense<0.000000e+00> : vector<8x64xf32>
    %155 = tpu.matmul %145, %154, %cst_56 {dimension_numbers = #tpu.dot_dimension_numbers<[1], [0], [0], [1], [0, 0, 1, 1], [], []>} : vector<8x32xf32>, vector<32x64xf32>, vector<8x64xf32> -> vector<8x64xf32>
    %c0_57 = arith.constant 0 : index
    %c0_58 = arith.constant 0 : index
    %156 = vector.load %arg11[%c0_57, %c0_58] : memref<1x64xf32, #tpu.memory_space<vmem>>, vector<1x64xf32>
    %157 = vector.shape_cast %156 : vector<1x64xf32> to vector<64xf32>
    %158 = vector.shape_cast %157 : vector<64xf32> to vector<1x64xf32>
    %159 = vector.broadcast %158 : vector<1x64xf32> to vector<8x64xf32>
    %160 = arith.addf %155, %159 : vector<8x64xf32>
    %161 = vector.extract_strided_slice %160 {offsets = [0, 0], sizes = [8, 32], strides = [1, 1]} : vector<8x64xf32> to vector<8x32xf32>
    %162 = vector.shape_cast %161 : vector<8x32xf32> to vector<1x8x32xf32>
    %163 = vector.extract_strided_slice %160 {offsets = [0, 32], sizes = [8, 32], strides = [1, 1]} : vector<8x64xf32> to vector<8x32xf32>
    %164 = vector.shape_cast %163 : vector<8x32xf32> to vector<1x8x32xf32>
    %c0_59 = arith.constant 0 : index
    %c0_60 = arith.constant 0 : index
    %165 = vector.load %arg12[%c0_59, %c0_60] : memref<32x32xf32, #tpu.memory_space<vmem>>, vector<32x32xf32>
    %cst_61 = arith.constant 0.000000e+00 : f32
    %166 = vector.broadcast %cst_61 : f32 to vector<8x32xf32>
    %167 = vector.extract_strided_slice %153 {offsets = [0, 0, 0], sizes = [1, 8, 8], strides = [1, 1, 1]} : vector<1x8x32xf32> to vector<1x8x8xf32>
    %168 = vector.extract_strided_slice %162 {offsets = [0, 0, 0], sizes = [1, 8, 8], strides = [1, 1, 1]} : vector<1x8x32xf32> to vector<1x8x8xf32>
    "tpu.trace_start"() <{level = 10 : i32, message = "bqd,bkd->bqk"}> : () -> ()
    %cst_62 = arith.constant dense<0.000000e+00> : vector<1x8x8xf32>
    %169 = tpu.matmul %167, %168, %cst_62 {dimension_numbers = #tpu.dot_dimension_numbers<[2], [2], [1], [1], [0, 0, 0, 1, 1, 1], [0], [0]>} : vector<1x8x8xf32>, vector<1x8x8xf32>, vector<1x8x8xf32> -> vector<1x8x8xf32>
    "tpu.trace_stop"() : () -> ()
    %cst_63 = arith.constant 0.353553385 : f32
    %170 = vector.broadcast %cst_63 : f32 to vector<1x8x8xf32>
    %171 = arith.mulf %169, %170 : vector<1x8x8xf32>
    %cst_64 = arith.constant dense<0xFF800000> : vector<1x8xf32>
    %172 = vector.multi_reduction <maximumf>, %171, %cst_64 [2] : vector<1x8x8xf32> to vector<1x8xf32>
    %173 = vector.shape_cast %172 : vector<1x8xf32> to vector<1x8x1xf32>
    %174 = vector.broadcast %173 : vector<1x8x1xf32> to vector<1x8x8xf32>
    %175 = arith.subf %171, %174 : vector<1x8x8xf32>
    %176 = math.exp %175 : vector<1x8x8xf32>
    %cst_65 = arith.constant dense<0.000000e+00> : vector<1x8xf32>
    %177 = vector.multi_reduction <add>, %176, %cst_65 [2] : vector<1x8x8xf32> to vector<1x8xf32>
    %178 = vector.shape_cast %177 : vector<1x8xf32> to vector<1x8x1xf32>
    %179 = tpu.reciprocal %178 {approx = true} : vector<1x8x1xf32> -> vector<1x8x1xf32>
    %180 = vector.broadcast %179 : vector<1x8x1xf32> to vector<1x8x8xf32>
    %181 = arith.mulf %176, %180 : vector<1x8x8xf32>
    %182 = vector.extract_strided_slice %164 {offsets = [0, 0, 0], sizes = [1, 8, 8], strides = [1, 1, 1]} : vector<1x8x32xf32> to vector<1x8x8xf32>
    "tpu.trace_start"() <{level = 10 : i32, message = "bqk,bkd->bqd"}> : () -> ()
    %cst_66 = arith.constant dense<0.000000e+00> : vector<1x8x8xf32>
    %183 = tpu.matmul %181, %182, %cst_66 {dimension_numbers = #tpu.dot_dimension_numbers<[2], [1], [1], [2], [0, 0, 0, 1, 1, 2], [0], [0]>} : vector<1x8x8xf32>, vector<1x8x8xf32>, vector<1x8x8xf32> -> vector<1x8x8xf32>
    "tpu.trace_stop"() : () -> ()
    %184 = vector.shape_cast %183 : vector<1x8x8xf32> to vector<8x8xf32>
    %185 = vector.extract_strided_slice %165 {offsets = [0, 0], sizes = [8, 32], strides = [1, 1]} : vector<32x32xf32> to vector<8x32xf32>
    %cst_67 = arith.constant dense<0.000000e+00> : vector<8x32xf32>
    %186 = tpu.matmul %184, %185, %cst_67 {dimension_numbers = #tpu.dot_dimension_numbers<[1], [0], [0], [1], [0, 0, 1, 1], [], []>} : vector<8x8xf32>, vector<8x32xf32>, vector<8x32xf32> -> vector<8x32xf32>
    %187 = arith.addf %166, %186 : vector<8x32xf32>
    %188 = vector.extract_strided_slice %153 {offsets = [0, 0, 8], sizes = [1, 8, 8], strides = [1, 1, 1]} : vector<1x8x32xf32> to vector<1x8x8xf32>
    %189 = vector.extract_strided_slice %162 {offsets = [0, 0, 8], sizes = [1, 8, 8], strides = [1, 1, 1]} : vector<1x8x32xf32> to vector<1x8x8xf32>
    "tpu.trace_start"() <{level = 10 : i32, message = "bqd,bkd->bqk"}> : () -> ()
    %cst_68 = arith.constant dense<0.000000e+00> : vector<1x8x8xf32>
    %190 = tpu.matmul %188, %189, %cst_68 {dimension_numbers = #tpu.dot_dimension_numbers<[2], [2], [1], [1], [0, 0, 0, 1, 1, 1], [0], [0]>} : vector<1x8x8xf32>, vector<1x8x8xf32>, vector<1x8x8xf32> -> vector<1x8x8xf32>
    "tpu.trace_stop"() : () -> ()
    %cst_69 = arith.constant 0.353553385 : f32
    %191 = vector.broadcast %cst_69 : f32 to vector<1x8x8xf32>
    %192 = arith.mulf %190, %191 : vector<1x8x8xf32>
    %cst_70 = arith.constant dense<0xFF800000> : vector<1x8xf32>
    %193 = vector.multi_reduction <maximumf>, %192, %cst_70 [2] : vector<1x8x8xf32> to vector<1x8xf32>
    %194 = vector.shape_cast %193 : vector<1x8xf32> to vector<1x8x1xf32>
    %195 = vector.broadcast %194 : vector<1x8x1xf32> to vector<1x8x8xf32>
    %196 = arith.subf %192, %195 : vector<1x8x8xf32>
    %197 = math.exp %196 : vector<1x8x8xf32>
    %cst_71 = arith.constant dense<0.000000e+00> : vector<1x8xf32>
    %198 = vector.multi_reduction <add>, %197, %cst_71 [2] : vector<1x8x8xf32> to vector<1x8xf32>
    %199 = vector.shape_cast %198 : vector<1x8xf32> to vector<1x8x1xf32>
    %200 = tpu.reciprocal %199 {approx = true} : vector<1x8x1xf32> -> vector<1x8x1xf32>
    %201 = vector.broadcast %200 : vector<1x8x1xf32> to vector<1x8x8xf32>
    %202 = arith.mulf %197, %201 : vector<1x8x8xf32>
    %203 = vector.extract_strided_slice %164 {offsets = [0, 0, 8], sizes = [1, 8, 8], strides = [1, 1, 1]} : vector<1x8x32xf32> to vector<1x8x8xf32>
    "tpu.trace_start"() <{level = 10 : i32, message = "bqk,bkd->bqd"}> : () -> ()
    %cst_72 = arith.constant dense<0.000000e+00> : vector<1x8x8xf32>
    %204 = tpu.matmul %202, %203, %cst_72 {dimension_numbers = #tpu.dot_dimension_numbers<[2], [1], [1], [2], [0, 0, 0, 1, 1, 2], [0], [0]>} : vector<1x8x8xf32>, vector<1x8x8xf32>, vector<1x8x8xf32> -> vector<1x8x8xf32>
    "tpu.trace_stop"() : () -> ()
    %205 = vector.shape_cast %204 : vector<1x8x8xf32> to vector<8x8xf32>
    %206 = vector.extract_strided_slice %165 {offsets = [8, 0], sizes = [8, 32], strides = [1, 1]} : vector<32x32xf32> to vector<8x32xf32>
    %cst_73 = arith.constant dense<0.000000e+00> : vector<8x32xf32>
    %207 = tpu.matmul %205, %206, %cst_73 {dimension_numbers = #tpu.dot_dimension_numbers<[1], [0], [0], [1], [0, 0, 1, 1], [], []>} : vector<8x8xf32>, vector<8x32xf32>, vector<8x32xf32> -> vector<8x32xf32>
    %208 = arith.addf %187, %207 : vector<8x32xf32>
    %209 = vector.extract_strided_slice %153 {offsets = [0, 0, 16], sizes = [1, 8, 8], strides = [1, 1, 1]} : vector<1x8x32xf32> to vector<1x8x8xf32>
    %210 = vector.extract_strided_slice %162 {offsets = [0, 0, 16], sizes = [1, 8, 8], strides = [1, 1, 1]} : vector<1x8x32xf32> to vector<1x8x8xf32>
    "tpu.trace_start"() <{level = 10 : i32, message = "bqd,bkd->bqk"}> : () -> ()
    %cst_74 = arith.constant dense<0.000000e+00> : vector<1x8x8xf32>
    %211 = tpu.matmul %209, %210, %cst_74 {dimension_numbers = #tpu.dot_dimension_numbers<[2], [2], [1], [1], [0, 0, 0, 1, 1, 1], [0], [0]>} : vector<1x8x8xf32>, vector<1x8x8xf32>, vector<1x8x8xf32> -> vector<1x8x8xf32>
    "tpu.trace_stop"() : () -> ()
    %cst_75 = arith.constant 0.353553385 : f32
    %212 = vector.broadcast %cst_75 : f32 to vector<1x8x8xf32>
    %213 = arith.mulf %211, %212 : vector<1x8x8xf32>
    %cst_76 = arith.constant dense<0xFF800000> : vector<1x8xf32>
    %214 = vector.multi_reduction <maximumf>, %213, %cst_76 [2] : vector<1x8x8xf32> to vector<1x8xf32>
    %215 = vector.shape_cast %214 : vector<1x8xf32> to vector<1x8x1xf32>
    %216 = vector.broadcast %215 : vector<1x8x1xf32> to vector<1x8x8xf32>
    %217 = arith.subf %213, %216 : vector<1x8x8xf32>
    %218 = math.exp %217 : vector<1x8x8xf32>
    %cst_77 = arith.constant dense<0.000000e+00> : vector<1x8xf32>
    %219 = vector.multi_reduction <add>, %218, %cst_77 [2] : vector<1x8x8xf32> to vector<1x8xf32>
    %220 = vector.shape_cast %219 : vector<1x8xf32> to vector<1x8x1xf32>
    %221 = tpu.reciprocal %220 {approx = true} : vector<1x8x1xf32> -> vector<1x8x1xf32>
    %222 = vector.broadcast %221 : vector<1x8x1xf32> to vector<1x8x8xf32>
    %223 = arith.mulf %218, %222 : vector<1x8x8xf32>
    %224 = vector.extract_strided_slice %164 {offsets = [0, 0, 16], sizes = [1, 8, 8], strides = [1, 1, 1]} : vector<1x8x32xf32> to vector<1x8x8xf32>
    "tpu.trace_start"() <{level = 10 : i32, message = "bqk,bkd->bqd"}> : () -> ()
    %cst_78 = arith.constant dense<0.000000e+00> : vector<1x8x8xf32>
    %225 = tpu.matmul %223, %224, %cst_78 {dimension_numbers = #tpu.dot_dimension_numbers<[2], [1], [1], [2], [0, 0, 0, 1, 1, 2], [0], [0]>} : vector<1x8x8xf32>, vector<1x8x8xf32>, vector<1x8x8xf32> -> vector<1x8x8xf32>
    "tpu.trace_stop"() : () -> ()
    %226 = vector.shape_cast %225 : vector<1x8x8xf32> to vector<8x8xf32>
    %227 = vector.extract_strided_slice %165 {offsets = [16, 0], sizes = [8, 32], strides = [1, 1]} : vector<32x32xf32> to vector<8x32xf32>
    %cst_79 = arith.constant dense<0.000000e+00> : vector<8x32xf32>
    %228 = tpu.matmul %226, %227, %cst_79 {dimension_numbers = #tpu.dot_dimension_numbers<[1], [0], [0], [1], [0, 0, 1, 1], [], []>} : vector<8x8xf32>, vector<8x32xf32>, vector<8x32xf32> -> vector<8x32xf32>
    %229 = arith.addf %208, %228 : vector<8x32xf32>
    %230 = vector.extract_strided_slice %153 {offsets = [0, 0, 24], sizes = [1, 8, 8], strides = [1, 1, 1]} : vector<1x8x32xf32> to vector<1x8x8xf32>
    %231 = vector.extract_strided_slice %162 {offsets = [0, 0, 24], sizes = [1, 8, 8], strides = [1, 1, 1]} : vector<1x8x32xf32> to vector<1x8x8xf32>
    "tpu.trace_start"() <{level = 10 : i32, message = "bqd,bkd->bqk"}> : () -> ()
    %cst_80 = arith.constant dense<0.000000e+00> : vector<1x8x8xf32>
    %232 = tpu.matmul %230, %231, %cst_80 {dimension_numbers = #tpu.dot_dimension_numbers<[2], [2], [1], [1], [0, 0, 0, 1, 1, 1], [0], [0]>} : vector<1x8x8xf32>, vector<1x8x8xf32>, vector<1x8x8xf32> -> vector<1x8x8xf32>
    "tpu.trace_stop"() : () -> ()
    %cst_81 = arith.constant 0.353553385 : f32
    %233 = vector.broadcast %cst_81 : f32 to vector<1x8x8xf32>
    %234 = arith.mulf %232, %233 : vector<1x8x8xf32>
    %cst_82 = arith.constant dense<0xFF800000> : vector<1x8xf32>
    %235 = vector.multi_reduction <maximumf>, %234, %cst_82 [2] : vector<1x8x8xf32> to vector<1x8xf32>
    %236 = vector.shape_cast %235 : vector<1x8xf32> to vector<1x8x1xf32>
    %237 = vector.broadcast %236 : vector<1x8x1xf32> to vector<1x8x8xf32>
    %238 = arith.subf %234, %237 : vector<1x8x8xf32>
    %239 = math.exp %238 : vector<1x8x8xf32>
    %cst_83 = arith.constant dense<0.000000e+00> : vector<1x8xf32>
    %240 = vector.multi_reduction <add>, %239, %cst_83 [2] : vector<1x8x8xf32> to vector<1x8xf32>
    %241 = vector.shape_cast %240 : vector<1x8xf32> to vector<1x8x1xf32>
    %242 = tpu.reciprocal %241 {approx = true} : vector<1x8x1xf32> -> vector<1x8x1xf32>
    %243 = vector.broadcast %242 : vector<1x8x1xf32> to vector<1x8x8xf32>
    %244 = arith.mulf %239, %243 : vector<1x8x8xf32>
    %245 = vector.extract_strided_slice %164 {offsets = [0, 0, 24], sizes = [1, 8, 8], strides = [1, 1, 1]} : vector<1x8x32xf32> to vector<1x8x8xf32>
    "tpu.trace_start"() <{level = 10 : i32, message = "bqk,bkd->bqd"}> : () -> ()
    %cst_84 = arith.constant dense<0.000000e+00> : vector<1x8x8xf32>
    %246 = tpu.matmul %244, %245, %cst_84 {dimension_numbers = #tpu.dot_dimension_numbers<[2], [1], [1], [2], [0, 0, 0, 1, 1, 2], [0], [0]>} : vector<1x8x8xf32>, vector<1x8x8xf32>, vector<1x8x8xf32> -> vector<1x8x8xf32>
    "tpu.trace_stop"() : () -> ()
    %247 = vector.shape_cast %246 : vector<1x8x8xf32> to vector<8x8xf32>
    %248 = vector.extract_strided_slice %165 {offsets = [24, 0], sizes = [8, 32], strides = [1, 1]} : vector<32x32xf32> to vector<8x32xf32>
    %cst_85 = arith.constant dense<0.000000e+00> : vector<8x32xf32>
    %249 = tpu.matmul %247, %248, %cst_85 {dimension_numbers = #tpu.dot_dimension_numbers<[1], [0], [0], [1], [0, 0, 1, 1], [], []>} : vector<8x8xf32>, vector<8x32xf32>, vector<8x32xf32> -> vector<8x32xf32>
    %250 = arith.addf %229, %249 : vector<8x32xf32>
    %c0_86 = arith.constant 0 : index
    %c0_87 = arith.constant 0 : index
    %251 = vector.load %arg13[%c0_86, %c0_87] : memref<1x32xf32, #tpu.memory_space<vmem>>, vector<1x32xf32>
    %252 = vector.shape_cast %251 : vector<1x32xf32> to vector<32xf32>
    %253 = vector.shape_cast %252 : vector<32xf32> to vector<1x32xf32>
    %254 = vector.broadcast %253 : vector<1x32xf32> to vector<8x32xf32>
    %255 = arith.addf %250, %254 : vector<8x32xf32>
    %256 = arith.addf %144, %255 : vector<8x32xf32>
    %c0_88 = arith.constant 0 : index
    %c0_89 = arith.constant 0 : index
    %257 = vector.load %arg20[%c0_88, %c0_89] : memref<1x32xf32, #tpu.memory_space<vmem>>, vector<1x32xf32>
    %258 = vector.shape_cast %257 : vector<1x32xf32> to vector<32xf32>
    %c0_90 = arith.constant 0 : index
    %c0_91 = arith.constant 0 : index
    %259 = vector.load %arg21[%c0_90, %c0_91] : memref<1x32xf32, #tpu.memory_space<vmem>>, vector<1x32xf32>
    %260 = vector.shape_cast %259 : vector<1x32xf32> to vector<32xf32>
    %cst_92 = arith.constant dense<0.000000e+00> : vector<8xf32>
    %261 = vector.multi_reduction <add>, %256, %cst_92 [1] : vector<8x32xf32> to vector<8xf32>
    %262 = vector.shape_cast %261 : vector<8xf32> to vector<8x1xf32>
    %cst_93 = arith.constant 3.200000e+01 : f32
    %263 = vector.broadcast %cst_93 : f32 to vector<8x1xf32>
    %264 = arith.divf %262, %263 : vector<8x1xf32>
    %265 = vector.broadcast %264 : vector<8x1xf32> to vector<8x32xf32>
    %266 = arith.subf %256, %265 : vector<8x32xf32>
    %267 = arith.mulf %266, %266 : vector<8x32xf32>
    %cst_94 = arith.constant dense<0.000000e+00> : vector<8xf32>
    %268 = vector.multi_reduction <add>, %267, %cst_94 [1] : vector<8x32xf32> to vector<8xf32>
    %269 = vector.shape_cast %268 : vector<8xf32> to vector<8x1xf32>
    %cst_95 = arith.constant 3.200000e+01 : f32
    %270 = vector.broadcast %cst_95 : f32 to vector<8x1xf32>
    %271 = arith.divf %269, %270 : vector<8x1xf32>
    %272 = vector.broadcast %264 : vector<8x1xf32> to vector<8x32xf32>
    %273 = arith.subf %256, %272 : vector<8x32xf32>
    %cst_96 = arith.constant 9.99999974E-6 : f32
    %274 = vector.broadcast %cst_96 : f32 to vector<8x1xf32>
    %275 = arith.addf %271, %274 : vector<8x1xf32>
    %276 = math.rsqrt %275 : vector<8x1xf32>
    %277 = vector.broadcast %276 : vector<8x1xf32> to vector<8x32xf32>
    %278 = arith.mulf %273, %277 : vector<8x32xf32>
    %279 = vector.shape_cast %258 : vector<32xf32> to vector<1x32xf32>
    %280 = vector.broadcast %279 : vector<1x32xf32> to vector<8x32xf32>
    %281 = arith.mulf %278, %280 : vector<8x32xf32>
    %282 = vector.shape_cast %260 : vector<32xf32> to vector<1x32xf32>
    %283 = vector.broadcast %282 : vector<1x32xf32> to vector<8x32xf32>
    %284 = arith.addf %281, %283 : vector<8x32xf32>
    %c0_97 = arith.constant 0 : index
    %c0_98 = arith.constant 0 : index
    %285 = vector.load %arg14[%c0_97, %c0_98] : memref<32x64xf32, #tpu.memory_space<vmem>>, vector<32x64xf32>
    %cst_99 = arith.constant dense<0.000000e+00> : vector<8x64xf32>
    %286 = tpu.matmul %284, %285, %cst_99 {dimension_numbers = #tpu.dot_dimension_numbers<[1], [0], [0], [1], [0, 0, 1, 1], [], []>} : vector<8x32xf32>, vector<32x64xf32>, vector<8x64xf32> -> vector<8x64xf32>
    %c0_100 = arith.constant 0 : index
    %c0_101 = arith.constant 0 : index
    %287 = vector.load %arg15[%c0_100, %c0_101] : memref<1x64xf32, #tpu.memory_space<vmem>>, vector<1x64xf32>
    %288 = vector.shape_cast %287 : vector<1x64xf32> to vector<64xf32>
    %289 = vector.shape_cast %288 : vector<64xf32> to vector<1x64xf32>
    %290 = vector.broadcast %289 : vector<1x64xf32> to vector<8x64xf32>
    %291 = arith.addf %286, %290 : vector<8x64xf32>
    %cst_102 = arith.constant 5.000000e-01 : f32
    %292 = vector.broadcast %cst_102 : f32 to vector<8x64xf32>
    %293 = arith.mulf %292, %291 : vector<8x64xf32>
    %cst_103 = arith.constant 0.707106769 : f32
    %294 = vector.broadcast %cst_103 : f32 to vector<8x64xf32>
    %295 = arith.mulf %291, %294 : vector<8x64xf32>
    %296 = math.erf %295 : vector<8x64xf32>
    %cst_104 = arith.constant 1.000000e+00 : f32
    %297 = vector.broadcast %cst_104 : f32 to vector<8x64xf32>
    %298 = arith.addf %297, %296 : vector<8x64xf32>
    %299 = arith.mulf %293, %298 : vector<8x64xf32>
    %c0_105 = arith.constant 0 : index
    %c0_106 = arith.constant 0 : index
    %300 = vector.load %arg16[%c0_105, %c0_106] : memref<64x32xf32, #tpu.memory_space<vmem>>, vector<64x32xf32>
    %cst_107 = arith.constant dense<0.000000e+00> : vector<8x32xf32>
    %301 = tpu.matmul %299, %300, %cst_107 {dimension_numbers = #tpu.dot_dimension_numbers<[1], [0], [0], [1], [0, 0, 1, 1], [], []>} : vector<8x64xf32>, vector<64x32xf32>, vector<8x32xf32> -> vector<8x32xf32>
    %c0_108 = arith.constant 0 : index
    %c0_109 = arith.constant 0 : index
    %302 = vector.load %arg17[%c0_108, %c0_109] : memref<1x32xf32, #tpu.memory_space<vmem>>, vector<1x32xf32>
    %303 = vector.shape_cast %302 : vector<1x32xf32> to vector<32xf32>
    %304 = vector.shape_cast %303 : vector<32xf32> to vector<1x32xf32>
    %305 = vector.broadcast %304 : vector<1x32xf32> to vector<8x32xf32>
    %306 = arith.addf %301, %305 : vector<8x32xf32>
    %307 = arith.addf %284, %306 : vector<8x32xf32>
    %c0_110 = arith.constant 0 : index
    %c0_111 = arith.constant 0 : index
    %308 = vector.load %arg22[%c0_110, %c0_111] : memref<1x32xf32, #tpu.memory_space<vmem>>, vector<1x32xf32>
    %309 = vector.shape_cast %308 : vector<1x32xf32> to vector<32xf32>
    %c0_112 = arith.constant 0 : index
    %c0_113 = arith.constant 0 : index
    %310 = vector.load %arg23[%c0_112, %c0_113] : memref<1x32xf32, #tpu.memory_space<vmem>>, vector<1x32xf32>
    %311 = vector.shape_cast %310 : vector<1x32xf32> to vector<32xf32>
    %cst_114 = arith.constant dense<0.000000e+00> : vector<8xf32>
    %312 = vector.multi_reduction <add>, %307, %cst_114 [1] : vector<8x32xf32> to vector<8xf32>
    %313 = vector.shape_cast %312 : vector<8xf32> to vector<8x1xf32>
    %cst_115 = arith.constant 3.200000e+01 : f32
    %314 = vector.broadcast %cst_115 : f32 to vector<8x1xf32>
    %315 = arith.divf %313, %314 : vector<8x1xf32>
    %316 = vector.broadcast %315 : vector<8x1xf32> to vector<8x32xf32>
    %317 = arith.subf %307, %316 : vector<8x32xf32>
    %318 = arith.mulf %317, %317 : vector<8x32xf32>
    %cst_116 = arith.constant dense<0.000000e+00> : vector<8xf32>
    %319 = vector.multi_reduction <add>, %318, %cst_116 [1] : vector<8x32xf32> to vector<8xf32>
    %320 = vector.shape_cast %319 : vector<8xf32> to vector<8x1xf32>
    %cst_117 = arith.constant 3.200000e+01 : f32
    %321 = vector.broadcast %cst_117 : f32 to vector<8x1xf32>
    %322 = arith.divf %320, %321 : vector<8x1xf32>
    %323 = vector.broadcast %315 : vector<8x1xf32> to vector<8x32xf32>
    %324 = arith.subf %307, %323 : vector<8x32xf32>
    %cst_118 = arith.constant 9.99999974E-6 : f32
    %325 = vector.broadcast %cst_118 : f32 to vector<8x1xf32>
    %326 = arith.addf %322, %325 : vector<8x1xf32>
    %327 = math.rsqrt %326 : vector<8x1xf32>
    %328 = vector.broadcast %327 : vector<8x1xf32> to vector<8x32xf32>
    %329 = arith.mulf %324, %328 : vector<8x32xf32>
    %330 = vector.shape_cast %309 : vector<32xf32> to vector<1x32xf32>
    %331 = vector.broadcast %330 : vector<1x32xf32> to vector<8x32xf32>
    %332 = arith.mulf %329, %331 : vector<8x32xf32>
    %333 = vector.shape_cast %311 : vector<32xf32> to vector<1x32xf32>
    %334 = vector.broadcast %333 : vector<1x32xf32> to vector<8x32xf32>
    %335 = arith.addf %332, %334 : vector<8x32xf32>
    %336 = vector.shape_cast %335 : vector<8x32xf32> to vector<1x8x32xf32>
    %c0_119 = arith.constant 0 : index
    %c0_120 = arith.constant 0 : index
    %c0_121 = arith.constant 0 : index
    %337 = vector.load %arg24[%c0_119, %c0_120, %c0_121] : memref<1x8x32xf32, #tpu.memory_space<vmem>>, vector<1x8x32xf32>
    tpu.vector_store %arg24[%c0_119, %c0_120, %c0_121], %336 {strides = array<i32>} : memref<1x8x32xf32, #tpu.memory_space<vmem>>, vector<1x8x32xf32>,
    return
  }
  func.func @transform_0(%arg0: i32) -> (i32, i32, i32) {
    %c0_i32 = arith.constant 0 : i32
    %c0_i32_0 = arith.constant 0 : i32
    %c0_i32_1 = arith.constant 0 : i32
    return %arg0, %c0_i32, %c0_i32_0 : i32, i32, i32
  }
  func.func @transform_1(%arg0: i32) -> (i32, i32, i32) {
    %c0_i32 = arith.constant 0 : i32
    %c0_i32_0 = arith.constant 0 : i32
    %c0_i32_1 = arith.constant 0 : i32
    return %arg0, %c0_i32, %c0_i32_0 : i32, i32, i32
  }
  func.func @transform_2(%arg0: i32) -> (i32, i32) {
    %c0_i32 = arith.constant 0 : i32
    %c0_i32_0 = arith.constant 0 : i32
    %c0_i32_1 = arith.constant 0 : i32
    return %c0_i32, %c0_i32_0 : i32, i32
  }
  func.func @transform_3(%arg0: i32) -> (i32, i32) {
    %c0_i32 = arith.constant 0 : i32
    %c0_i32_0 = arith.constant 0 : i32
    %c0_i32_1 = arith.constant 0 : i32
    return %c0_i32, %c0_i32_0 : i32, i32
  }
  func.func @transform_4(%arg0: i32) -> (i32, i32) {
    %c0_i32 = arith.constant 0 : i32
    %c0_i32_0 = arith.constant 0 : i32
    %c0_i32_1 = arith.constant 0 : i32
    return %c0_i32, %c0_i32_0 : i32, i32
  }
  func.func @transform_5(%arg0: i32) -> (i32, i32) {
    %c0_i32 = arith.constant 0 : i32
    %c0_i32_0 = arith.constant 0 : i32
    %c0_i32_1 = arith.constant 0 : i32
    return %c0_i32, %c0_i32_0 : i32, i32
  }
  func.func @transform_6(%arg0: i32) -> (i32, i32) {
    %c0_i32 = arith.constant 0 : i32
    %c0_i32_0 = arith.constant 0 : i32
    %c0_i32_1 = arith.constant 0 : i32
    return %c0_i32, %c0_i32_0 : i32, i32
  }
  func.func @transform_7(%arg0: i32) -> (i32, i32) {
    %c0_i32 = arith.constant 0 : i32
    %c0_i32_0 = arith.constant 0 : i32
    %c0_i32_1 = arith.constant 0 : i32
    return %c0_i32, %c0_i32_0 : i32, i32
  }
  func.func @transform_8(%arg0: i32) -> (i32, i32) {
    %c0_i32 = arith.constant 0 : i32
    %c0_i32_0 = arith.constant 0 : i32
    %c0_i32_1 = arith.constant 0 : i32
    return %c0_i32, %c0_i32_0 : i32, i32
  }
  func.func @transform_9(%arg0: i32) -> (i32, i32) {
    %c0_i32 = arith.constant 0 : i32
    %c0_i32_0 = arith.constant 0 : i32
    %c0_i32_1 = arith.constant 0 : i32
    return %c0_i32, %c0_i32_0 : i32, i32
  }
  func.func @transform_10(%arg0: i32) -> (i32, i32) {
    %c0_i32 = arith.constant 0 : i32
    %c0_i32_0 = arith.constant 0 : i32
    %c0_i32_1 = arith.constant 0 : i32
    return %c0_i32, %c0_i32_0 : i32, i32
  }
  func.func @transform_11(%arg0: i32) -> (i32, i32) {
    %c0_i32 = arith.constant 0 : i32
    %c0_i32_0 = arith.constant 0 : i32
    %c0_i32_1 = arith.constant 0 : i32
    return %c0_i32, %c0_i32_0 : i32, i32
  }
  func.func @transform_12(%arg0: i32) -> (i32, i32) {
    %c0_i32 = arith.constant 0 : i32
    %c0_i32_0 = arith.constant 0 : i32
    %c0_i32_1 = arith.constant 0 : i32
    return %c0_i32, %c0_i32_0 : i32, i32
  }
  func.func @transform_13(%arg0: i32) -> (i32, i32) {
    %c0_i32 = arith.constant 0 : i32
    %c0_i32_0 = arith.constant 0 : i32
    %c0_i32_1 = arith.constant 0 : i32
    return %c0_i32, %c0_i32_0 : i32, i32
  }
  func.func @transform_14(%arg0: i32) -> (i32, i32) {
    %c0_i32 = arith.constant 0 : i32
    %c0_i32_0 = arith.constant 0 : i32
    %c0_i32_1 = arith.constant 0 : i32
    return %c0_i32, %c0_i32_0 : i32, i32
  }
  func.func @transform_15(%arg0: i32) -> (i32, i32) {
    %c0_i32 = arith.constant 0 : i32
    %c0_i32_0 = arith.constant 0 : i32
    %c0_i32_1 = arith.constant 0 : i32
    return %c0_i32, %c0_i32_0 : i32, i32
  }
  func.func @transform_16(%arg0: i32) -> (i32, i32) {
    %c0_i32 = arith.constant 0 : i32
    %c0_i32_0 = arith.constant 0 : i32
    %c0_i32_1 = arith.constant 0 : i32
    return %c0_i32, %c0_i32_0 : i32, i32
  }
  func.func @transform_17(%arg0: i32) -> (i32, i32) {
    %c0_i32 = arith.constant 0 : i32
    %c0_i32_0 = arith.constant 0 : i32
    %c0_i32_1 = arith.constant 0 : i32
    return %c0_i32, %c0_i32_0 : i32, i32
  }
  func.func @transform_18(%arg0: i32) -> (i32, i32) {
    %c0_i32 = arith.constant 0 : i32
    %c0_i32_0 = arith.constant 0 : i32
    %c0_i32_1 = arith.constant 0 : i32
    return %c0_i32, %c0_i32_0 : i32, i32
  }
  func.func @transform_19(%arg0: i32) -> (i32, i32) {
    %c0_i32 = arith.constant 0 : i32
    %c0_i32_0 = arith.constant 0 : i32
    %c0_i32_1 = arith.constant 0 : i32
    return %c0_i32, %c0_i32_0 : i32, i32
  }
  func.func @transform_20(%arg0: i32) -> (i32, i32) {
    %c0_i32 = arith.constant 0 : i32
    %c0_i32_0 = arith.constant 0 : i32
    %c0_i32_1 = arith.constant 0 : i32
    return %c0_i32, %c0_i32_0 : i32, i32
  }
  func.func @transform_21(%arg0: i32) -> (i32, i32) {
    %c0_i32 = arith.constant 0 : i32
    %c0_i32_0 = arith.constant 0 : i32
    %c0_i32_1 = arith.constant 0 : i32
    return %c0_i32, %c0_i32_0 : i32, i32
  }
  func.func @transform_22(%arg0: i32) -> (i32, i32) {
    %c0_i32 = arith.constant 0 : i32
    %c0_i32_0 = arith.constant 0 : i32
    %c0_i32_1 = arith.constant 0 : i32
    return %c0_i32, %c0_i32_0 : i32, i32
  }
  func.func @transform_23(%arg0: i32) -> (i32, i32, i32) {
    %c0_i32 = arith.constant 0 : i32
    %c0_i32_0 = arith.constant 0 : i32
    %c0_i32_1 = arith.constant 0 : i32
    return %arg0, %c0_i32, %c0_i32_0 : i32, i32, i32
  }
}

</mosaic_0001>

<llo_original>
// kernel: tpu_custom_call.1
$region0: #{tpu_custom_call.1}
  #allocation0 [shape = 'u32[]', space=smem, size = 0x4, offset = 0x4, fixed_abs, tag = 'smem constant byte address 0x4 - core index']
  #allocation1 [shape = 'u32[72,128]{1,0:T(1,128)}', space=vmem, size = 0x9000, scoped, tag = 'internal scratch']
  %s0 = inlined_call_operand.hbm [shape: f32[2,8,32], index: 0, kind: input, shape index: {}]
  %s1 = inlined_call_operand.hbm [shape: f32[2,8,32], index: 1, kind: input, shape index: {}]
  %s2 = inlined_call_operand.hbm [shape: f32[8,8], index: 2, kind: input, shape index: {}]
  %s3 = inlined_call_operand.vmem [shape: f32[32,96], index: 3, kind: input, shape index: {}]
  %s4 = inlined_call_operand.vmem [shape: f32[1,96], index: 4, kind: input, shape index: {}]
  %s5 = inlined_call_operand.vmem [shape: f32[32,32], index: 5, kind: input, shape index: {}]
  %s6 = inlined_call_operand.vmem [shape: f32[1,32], index: 6, kind: input, shape index: {}]
  %s7 = inlined_call_operand.vmem [shape: f32[32,32], index: 7, kind: input, shape index: {}]
  %s8 = inlined_call_operand.vmem [shape: f32[1,32], index: 8, kind: input, shape index: {}]
  %s9 = inlined_call_operand.hbm [shape: f32[32,64], index: 9, kind: input, shape index: {}]
  %s10 = inlined_call_operand.vmem [shape: f32[1,64], index: 10, kind: input, shape index: {}]
  %s11 = inlined_call_operand.hbm [shape: f32[32,32], index: 11, kind: input, shape index: {}]
  %s12 = inlined_call_operand.vmem [shape: f32[1,32], index: 12, kind: input, shape index: {}]
  %s13 = inlined_call_operand.hbm [shape: f32[32,64], index: 13, kind: input, shape index: {}]
  %s14 = inlined_call_operand.vmem [shape: f32[1,64], index: 14, kind: input, shape index: {}]
  %s15 = inlined_call_operand.vmem [shape: f32[64,32], index: 15, kind: input, shape index: {}]
  %s16 = inlined_call_operand.vmem [shape: f32[1,32], index: 16, kind: input, shape index: {}]
  %s17 = inlined_call_operand.vmem [shape: f32[1,32], index: 17, kind: input, shape index: {}]
  %s18 = inlined_call_operand.vmem [shape: f32[1,32], index: 18, kind: input, shape index: {}]
  %s19 = inlined_call_operand.vmem [shape: f32[1,32], index: 19, kind: input, shape index: {}]
  %s20 = inlined_call_operand.vmem [shape: f32[1,32], index: 20, kind: input, shape index: {}]
  %s21 = inlined_call_operand.vmem [shape: f32[1,32], index: 21, kind: input, shape index: {}]
  %s22 = inlined_call_operand.vmem [shape: f32[1,32], index: 22, kind: input, shape index: {}]
  %s23 = inlined_call_operand.hbm [shape: f32[2,8,32], index: 23, kind: output, shape index: {}]
  %s24 = sld [smem:[#allocation0]]
  $region149: #{tpu_custom_call.1} parent=0
    _
  %s26 = ssub.s32 1, %s24
  %s27 = scalar_select 0, %s26, %s24
  $region1: #{tpu_custom_call.1} parent=0
    #allocation2 [shape = 'u8[8192]{0}', space=vmem, size = 0x2000, scoped, tag = 'input window, operand 0']
    #allocation3 [shape = 's32[2]{0}', space=sflag, size = 0x8, scoped, tag = 'scoped memory for tpu_custom_call.1']
    #allocation4 [shape = 's32[2]{0}', space=sflag, size = 0x8, scoped, tag = 'scoped memory for tpu_custom_call.1']
    #allocation5 [shape = 'u8[8192]{0}', space=vmem, size = 0x2000, scoped, tag = 'input window, operand 1']
    #allocation6 [shape = 's32[2]{0}', space=sflag, size = 0x8, scoped, tag = 'scoped memory for tpu_custom_call.1']
    #allocation7 [shape = 'u8[4096]{0}', space=vmem, size = 0x1000, scoped, tag = 'input window, operand 2, single buffered']
    #allocation8 [shape = 'u8[16384]{0}', space=vmem, size = 0x4000, scoped, tag = 'input window, operand 9, single buffered']
    #allocation9 [shape = 's32[1]{0}', space=sflag, size = 0x4, scoped, tag = 'scoped memory for tpu_custom_call.1']
    #allocation10 [shape = 'u8[16384]{0}', space=vmem, size = 0x4000, scoped, tag = 'input window, operand 11, single buffered']
    #allocation11 [shape = 'u8[16384]{0}', space=vmem, size = 0x4000, scoped, tag = 'input window, operand 13, single buffered']
    #allocation12 [shape = 's32[1]{0}', space=sflag, size = 0x4, scoped, tag = 'scoped memory for tpu_custom_call.1']
    #allocation13 [shape = 'u8[8192]{0}', space=vmem, size = 0x2000, scoped, tag = 'output window, operand 0']
    %28 = vsyncpa [#allocation3], 0
    %s29 = scalar_lea.sflag [#allocation3], 1
    %30 = vsyncpa %s29, 0
    %31 = vsyncpa [#allocation6], 0
    %s32 = scalar_lea.sflag [#allocation6], 1
    %33 = vsyncpa %s32, 0
    %34 = vsyncpa [#allocation9], 0
    %35 = vsyncpa [#allocation12], 0
    %36 = vsyncpa [#allocation4], 0
    %s37 = scalar_lea.sflag [#allocation4], 1
    %38 = vsyncpa %s37, 0
    loop: start=0, step=1, limit=4
    $region2: #{tpu_custom_call.1} parent=1 // loop_pre_header
      _
    $region3: #{tpu_custom_call.1} parent=1 // loop_header
      %s40 = sphi 0, %s44
      %p41 = scmp.ge.s32.totalorder %s40, 4
      %s50 = sphi 0, %s52
      %s53 = sphi 0, %s50
      %s54 = sphi 0, %s53
      %s70 = sphi 0, %s54
      %s76 = sphi 0, %s78
      %s79 = sphi 0, %s76
      %s80 = sphi 0, %s79
      %s96 = sphi 0, %s80
      %s100 = sphi 0, %s100
      %s102 = sphi 0, %s100
      %s103 = sphi 0, %s102
      %s117 = sphi 0, %s103
      %s121 = sphi 0, %s121
      %s123 = sphi 0, %s121
      %s124 = sphi 0, %s123
      %s138 = sphi 0, %s124
      %s142 = sphi 0, %s142
      %s144 = sphi 0, %s142
      %s145 = sphi 0, %s144
      %s159 = sphi 0, %s145
      %s163 = sphi 0, %s163
      %s165 = sphi 0, %s163
      %s166 = sphi 0, %s165
      %s180 = sphi 0, %s166
      %s184 = sphi 0, %s184
      %s186 = sphi 0, %s184
      %s187 = sphi 0, %s186
      %s201 = sphi 0, %s187
      %s205 = sphi 0, %s205
      %s207 = sphi 0, %s205
      %s208 = sphi 0, %s207
      %s222 = sphi 0, %s208
      %s226 = sphi 0, %s226
      %s228 = sphi 0, %s226
      %s229 = sphi 0, %s228
      %s243 = sphi 0, %s229
      %s247 = sphi 0, %s247
      %s249 = sphi 0, %s247
      %s250 = sphi 0, %s249
      %s264 = sphi 0, %s250
      %s268 = sphi 0, %s268
      %s270 = sphi 0, %s268
      %s271 = sphi 0, %s270
      %s285 = sphi 0, %s271
      %s289 = sphi 0, %s289
      %s291 = sphi 0, %s289
      %s292 = sphi 0, %s291
      %s306 = sphi 0, %s292
      %s310 = sphi 0, %s310
      %s312 = sphi 0, %s310
      %s313 = sphi 0, %s312
      %s327 = sphi 0, %s313
      %s331 = sphi 0, %s331
      %s333 = sphi 0, %s331
      %s334 = sphi 0, %s333
      %s348 = sphi 0, %s334
      %s352 = sphi 0, %s352
      %s354 = sphi 0, %s352
      %s355 = sphi 0, %s354
      %s369 = sphi 0, %s355
      %s373 = sphi 0, %s373
      %s375 = sphi 0, %s373
      %s376 = sphi 0, %s375
      %s390 = sphi 0, %s376
      %s394 = sphi 0, %s394
      %s396 = sphi 0, %s394
      %s397 = sphi 0, %s396
      %s411 = sphi 0, %s397
      %s415 = sphi 0, %s415
      %s417 = sphi 0, %s415
      %s418 = sphi 0, %s417
      %s432 = sphi 0, %s418
      %s436 = sphi 0, %s436
      %s438 = sphi 0, %s436
      %s439 = sphi 0, %s438
      %s453 = sphi 0, %s439
      %s457 = sphi 0, %s457
      %s459 = sphi 0, %s457
      %s460 = sphi 0, %s459
      %s474 = sphi 0, %s460
      %s478 = sphi 0, %s478
      %s480 = sphi 0, %s478
      %s481 = sphi 0, %s480
      %s495 = sphi 0, %s481
      %s499 = sphi 0, %s499
      %s501 = sphi 0, %s499
      %s502 = sphi 0, %s501
      %s516 = sphi 0, %s502
      %s520 = sphi 0, %s520
      %s522 = sphi 0, %s520
      %s523 = sphi 0, %s522
      %s537 = sphi 0, %s523
      %s543 = sphi 0, %s545
      %s546 = sphi 0, %s543
      %s547 = sphi 0, %s546
      %s563 = sphi 0, %s547
    $region4: #{tpu_custom_call.1} parent=1 // loop_header_branch
      %43 = sbr.rel (%p41) target = $region8
    $region5: #{tpu_custom_call.1} parent=1 // loop_body
      %s45 = ssub.s32 %s40, 1
      %s46 = ssub.s32 %s40, 2
      %s47 = sadd.s32 %s40, 1
      %s48 = ssub.s32 %s40, %s47
      %p49 = scmp.eq.s32.totalorder %s48, 0
      %s51 = sadd.s32 %s50, 1
      %s52 = scalar_select %p49, %s50, %s51
      %p55 = pneg %p49
      %p56 = scmp.eq.s32.totalorder %s40, 1
      %p57 = por %p55, %p56
      %p58 = scmp.ne.s32.totalorder %s50, %s53
      %p59 = scmp.eq.s32.totalorder %s40, 0
      %p60 = por %p58, %p59
      %p61 = scmp.ne.s32.totalorder %s50, %s53
      %p62 = scmp.eq.s32.totalorder %s45, 1
      %p63 = por %p61, %p62
      %p64 = scmp.ne.s32.totalorder %s53, %s54
      %p65 = scmp.eq.s32.totalorder %s45, 0
      %p66 = por %p64, %p65
      %p67 = scmp.ne.s32.totalorder %s53, %s54
      %p68 = scmp.eq.s32.totalorder %s46, 1
      %p69 = por %p67, %p68
      %p71 = scmp.ne.s32.totalorder %s54, %s70
      %p72 = scmp.eq.s32.totalorder %s46, 0
      %p73 = por %p71, %p72
      %s74 = ssub.s32 %s40, %s47
      %p75 = scmp.eq.s32.totalorder %s74, 0
      %s77 = sadd.s32 %s76, 1
      %s78 = scalar_select %p75, %s76, %s77
      %p81 = pneg %p75
      %p82 = scmp.eq.s32.totalorder %s40, 1
      %p83 = por %p81, %p82
      %p84 = scmp.ne.s32.totalorder %s76, %s79
      %p85 = scmp.eq.s32.totalorder %s40, 0
      %p86 = por %p84, %p85
      %p87 = scmp.ne.s32.totalorder %s76, %s79
      %p88 = scmp.eq.s32.totalorder %s45, 1
      %p89 = por %p87, %p88
      %p90 = scmp.ne.s32.totalorder %s79, %s80
      %p91 = scmp.eq.s32.totalorder %s45, 0
      %p92 = por %p90, %p91
      %p93 = scmp.ne.s32.totalorder %s79, %s80
      %p94 = scmp.eq.s32.totalorder %s46, 1
      %p95 = por %p93, %p94
      %p97 = scmp.ne.s32.totalorder %s80, %s96
      %p98 = scmp.eq.s32.totalorder %s46, 0
      %p99 = por %p97, %p98
      %s101 = sadd.s32 %s100, 1
      %p104 = scmp.eq.s32.totalorder %s40, 1
      %p105 = scmp.ne.s32.totalorder %s100, %s102
      %p106 = scmp.eq.s32.totalorder %s40, 0
      %p107 = por %p105, %p106
      %p108 = scmp.ne.s32.totalorder %s100, %s102
      %p109 = scmp.eq.s32.totalorder %s45, 1
      %p110 = por %p108, %p109
      %p111 = scmp.ne.s32.totalorder %s102, %s103
      %p112 = scmp.eq.s32.totalorder %s45, 0
      %p113 = por %p111, %p112
      %p114 = scmp.ne.s32.totalorder %s102, %s103
      %p115 = scmp.eq.s32.totalorder %s46, 1
      %p116 = por %p114, %p115
      %p118 = scmp.ne.s32.totalorder %s103, %s117
      %p119 = scmp.eq.s32.totalorder %s46, 0
      %p120 = por %p118, %p119
      %s122 = sadd.s32 %s121, 1
      %p125 = scmp.eq.s32.totalorder %s40, 1
      %p126 = scmp.ne.s32.totalorder %s121, %s123
      %p127 = scmp.eq.s32.totalorder %s40, 0
      %p128 = por %p126, %p127
      %p129 = scmp.ne.s32.totalorder %s121, %s123
      %p130 = scmp.eq.s32.totalorder %s45, 1
      %p131 = por %p129, %p130
      %p132 = scmp.ne.s32.totalorder %s123, %s124
      %p133 = scmp.eq.s32.totalorder %s45, 0
      %p134 = por %p132, %p133
      %p135 = scmp.ne.s32.totalorder %s123, %s124
      %p136 = scmp.eq.s32.totalorder %s46, 1
      %p137 = por %p135, %p136
      %p139 = scmp.ne.s32.totalorder %s124, %s138
      %p140 = scmp.eq.s32.totalorder %s46, 0
      %p141 = por %p139, %p140
      %s143 = sadd.s32 %s142, 1
      %p146 = scmp.eq.s32.totalorder %s40, 1
      %p147 = scmp.ne.s32.totalorder %s142, %s144
      %p148 = scmp.eq.s32.totalorder %s40, 0
      %p149 = por %p147, %p148
      %p150 = scmp.ne.s32.totalorder %s142, %s144
      %p151 = scmp.eq.s32.totalorder %s45, 1
      %p152 = por %p150, %p151
      %p153 = scmp.ne.s32.totalorder %s144, %s145
      %p154 = scmp.eq.s32.totalorder %s45, 0
      %p155 = por %p153, %p154
      %p156 = scmp.ne.s32.totalorder %s144, %s145
      %p157 = scmp.eq.s32.totalorder %s46, 1
      %p158 = por %p156, %p157
      %p160 = scmp.ne.s32.totalorder %s145, %s159
      %p161 = scmp.eq.s32.totalorder %s46, 0
      %p162 = por %p160, %p161
      %s164 = sadd.s32 %s163, 1
      %p167 = scmp.eq.s32.totalorder %s40, 1
      %p168 = scmp.ne.s32.totalorder %s163, %s165
      %p169 = scmp.eq.s32.totalorder %s40, 0
      %p170 = por %p168, %p169
      %p171 = scmp.ne.s32.totalorder %s163, %s165
      %p172 = scmp.eq.s32.totalorder %s45, 1
      %p173 = por %p171, %p172
      %p174 = scmp.ne.s32.totalorder %s165, %s166
      %p175 = scmp.eq.s32.totalorder %s45, 0
      %p176 = por %p174, %p175
      %p177 = scmp.ne.s32.totalorder %s165, %s166
      %p178 = scmp.eq.s32.totalorder %s46, 1
      %p179 = por %p177, %p178
      %p181 = scmp.ne.s32.totalorder %s166, %s180
      %p182 = scmp.eq.s32.totalorder %s46, 0
      %p183 = por %p181, %p182
      %s185 = sadd.s32 %s184, 1
      %p188 = scmp.eq.s32.totalorder %s40, 1
      %p189 = scmp.ne.s32.totalorder %s184, %s186
      %p190 = scmp.eq.s32.totalorder %s40, 0
      %p191 = por %p189, %p190
      %p192 = scmp.ne.s32.totalorder %s184, %s186
      %p193 = scmp.eq.s32.totalorder %s45, 1
      %p194 = por %p192, %p193
      %p195 = scmp.ne.s32.totalorder %s186, %s187
      %p196 = scmp.eq.s32.totalorder %s45, 0
      %p197 = por %p195, %p196
      %p198 = scmp.ne.s32.totalorder %s186, %s187
      %p199 = scmp.eq.s32.totalorder %s46, 1
      %p200 = por %p198, %p199
      %p202 = scmp.ne.s32.totalorder %s187, %s201
      %p203 = scmp.eq.s32.totalorder %s46, 0
      %p204 = por %p202, %p203
      %s206 = sadd.s32 %s205, 1
      %p209 = scmp.eq.s32.totalorder %s40, 1
      %p210 = scmp.ne.s32.totalorder %s205, %s207
      %p211 = scmp.eq.s32.totalorder %s40, 0
      %p212 = por %p210, %p211
      %p213 = scmp.ne.s32.totalorder %s205, %s207
      %p214 = scmp.eq.s32.totalorder %s45, 1
      %p215 = por %p213, %p214
      %p216 = scmp.ne.s32.totalorder %s207, %s208
      %p217 = scmp.eq.s32.totalorder %s45, 0
      %p218 = por %p216, %p217
      %p219 = scmp.ne.s32.totalorder %s207, %s208
      %p220 = scmp.eq.s32.totalorder %s46, 1
      %p221 = por %p219, %p220
      %p223 = scmp.ne.s32.totalorder %s208, %s222
      %p224 = scmp.eq.s32.totalorder %s46, 0
      %p225 = por %p223, %p224
      %s227 = sadd.s32 %s226, 1
      %p230 = scmp.eq.s32.totalorder %s40, 1
      %p231 = scmp.ne.s32.totalorder %s226, %s228
      %p232 = scmp.eq.s32.totalorder %s40, 0
      %p233 = por %p231, %p232
      %p234 = scmp.ne.s32.totalorder %s226, %s228
      %p235 = scmp.eq.s32.totalorder %s45, 1
      %p236 = por %p234, %p235
      %p237 = scmp.ne.s32.totalorder %s228, %s229
      %p238 = scmp.eq.s32.totalorder %s45, 0
      %p239 = por %p237, %p238
      %p240 = scmp.ne.s32.totalorder %s228, %s229
      %p241 = scmp.eq.s32.totalorder %s46, 1
      %p242 = por %p240, %p241
      %p244 = scmp.ne.s32.totalorder %s229, %s243
      %p245 = scmp.eq.s32.totalorder %s46, 0
      %p246 = por %p244, %p245
      %s248 = sadd.s32 %s247, 1
      %p251 = scmp.eq.s32.totalorder %s40, 1
      %p252 = scmp.ne.s32.totalorder %s247, %s249
      %p253 = scmp.eq.s32.totalorder %s40, 0
      %p254 = por %p252, %p253
      %p255 = scmp.ne.s32.totalorder %s247, %s249
      %p256 = scmp.eq.s32.totalorder %s45, 1
      %p257 = por %p255, %p256
      %p258 = scmp.ne.s32.totalorder %s249, %s250
      %p259 = scmp.eq.s32.totalorder %s45, 0
      %p260 = por %p258, %p259
      %p261 = scmp.ne.s32.totalorder %s249, %s250
      %p262 = scmp.eq.s32.totalorder %s46, 1
      %p263 = por %p261, %p262
      %p265 = scmp.ne.s32.totalorder %s250, %s264
      %p266 = scmp.eq.s32.totalorder %s46, 0
      %p267 = por %p265, %p266
      %s269 = sadd.s32 %s268, 1
      %p272 = scmp.eq.s32.totalorder %s40, 1
      %p273 = scmp.ne.s32.totalorder %s268, %s270
      %p274 = scmp.eq.s32.totalorder %s40, 0
      %p275 = por %p273, %p274
      %p276 = scmp.ne.s32.totalorder %s268, %s270
      %p277 = scmp.eq.s32.totalorder %s45, 1
      %p278 = por %p276, %p277
      %p279 = scmp.ne.s32.totalorder %s270, %s271
      %p280 = scmp.eq.s32.totalorder %s45, 0
      %p281 = por %p279, %p280
      %p282 = scmp.ne.s32.totalorder %s270, %s271
      %p283 = scmp.eq.s32.totalorder %s46, 1
      %p284 = por %p282, %p283
      %p286 = scmp.ne.s32.totalorder %s271, %s285
      %p287 = scmp.eq.s32.totalorder %s46, 0
      %p288 = por %p286, %p287
      %s290 = sadd.s32 %s289, 1
      %p293 = scmp.eq.s32.totalorder %s40, 1
      %p294 = scmp.ne.s32.totalorder %s289, %s291
      %p295 = scmp.eq.s32.totalorder %s40, 0
      %p296 = por %p294, %p295
      %p297 = scmp.ne.s32.totalorder %s289, %s291
      %p298 = scmp.eq.s32.totalorder %s45, 1
      %p299 = por %p297, %p298
      %p300 = scmp.ne.s32.totalorder %s291, %s292
      %p301 = scmp.eq.s32.totalorder %s45, 0
      %p302 = por %p300, %p301
      %p303 = scmp.ne.s32.totalorder %s291, %s292
      %p304 = scmp.eq.s32.totalorder %s46, 1
      %p305 = por %p303, %p304
      %p307 = scmp.ne.s32.totalorder %s292, %s306
      %p308 = scmp.eq.s32.totalorder %s46, 0
      %p309 = por %p307, %p308
      %s311 = sadd.s32 %s310, 1
      %p314 = scmp.eq.s32.totalorder %s40, 1
      %p315 = scmp.ne.s32.totalorder %s310, %s312
      %p316 = scmp.eq.s32.totalorder %s40, 0
      %p317 = por %p315, %p316
      %p318 = scmp.ne.s32.totalorder %s310, %s312
      %p319 = scmp.eq.s32.totalorder %s45, 1
      %p320 = por %p318, %p319
      %p321 = scmp.ne.s32.totalorder %s312, %s313
      %p322 = scmp.eq.s32.totalorder %s45, 0
      %p323 = por %p321, %p322
      %p324 = scmp.ne.s32.totalorder %s312, %s313
      %p325 = scmp.eq.s32.totalorder %s46, 1
      %p326 = por %p324, %p325
      %p328 = scmp.ne.s32.totalorder %s313, %s327
      %p329 = scmp.eq.s32.totalorder %s46, 0
      %p330 = por %p328, %p329
      %s332 = sadd.s32 %s331, 1
      %p335 = scmp.eq.s32.totalorder %s40, 1
      %p336 = scmp.ne.s32.totalorder %s331, %s333
      %p337 = scmp.eq.s32.totalorder %s40, 0
      %p338 = por %p336, %p337
      %p339 = scmp.ne.s32.totalorder %s331, %s333
      %p340 = scmp.eq.s32.totalorder %s45, 1
      %p341 = por %p339, %p340
      %p342 = scmp.ne.s32.totalorder %s333, %s334
      %p343 = scmp.eq.s32.totalorder %s45, 0
      %p344 = por %p342, %p343
      %p345 = scmp.ne.s32.totalorder %s333, %s334
      %p346 = scmp.eq.s32.totalorder %s46, 1
      %p347 = por %p345, %p346
      %p349 = scmp.ne.s32.totalorder %s334, %s348
      %p350 = scmp.eq.s32.totalorder %s46, 0
      %p351 = por %p349, %p350
      %s353 = sadd.s32 %s352, 1
      %p356 = scmp.eq.s32.totalorder %s40, 1
      %p357 = scmp.ne.s32.totalorder %s352, %s354
      %p358 = scmp.eq.s32.totalorder %s40, 0
      %p359 = por %p357, %p358
      %p360 = scmp.ne.s32.totalorder %s352, %s354
      %p361 = scmp.eq.s32.totalorder %s45, 1
      %p362 = por %p360, %p361
      %p363 = scmp.ne.s32.totalorder %s354, %s355
      %p364 = scmp.eq.s32.totalorder %s45, 0
      %p365 = por %p363, %p364
      %p366 = scmp.ne.s32.totalorder %s354, %s355
      %p367 = scmp.eq.s32.totalorder %s46, 1
      %p368 = por %p366, %p367
      %p370 = scmp.ne.s32.totalorder %s355, %s369
      %p371 = scmp.eq.s32.totalorder %s46, 0
      %p372 = por %p370, %p371
      %s374 = sadd.s32 %s373, 1
      %p377 = scmp.eq.s32.totalorder %s40, 1
      %p378 = scmp.ne.s32.totalorder %s373, %s375
      %p379 = scmp.eq.s32.totalorder %s40, 0
      %p380 = por %p378, %p379
      %p381 = scmp.ne.s32.totalorder %s373, %s375
      %p382 = scmp.eq.s32.totalorder %s45, 1
      %p383 = por %p381, %p382
      %p384 = scmp.ne.s32.totalorder %s375, %s376
      %p385 = scmp.eq.s32.totalorder %s45, 0
      %p386 = por %p384, %p385
      %p387 = scmp.ne.s32.totalorder %s375, %s376
      %p388 = scmp.eq.s32.totalorder %s46, 1
      %p389 = por %p387, %p388
      %p391 = scmp.ne.s32.totalorder %s376, %s390
      %p392 = scmp.eq.s32.totalorder %s46, 0
      %p393 = por %p391, %p392
      %s395 = sadd.s32 %s394, 1
      %p398 = scmp.eq.s32.totalorder %s40, 1
      %p399 = scmp.ne.s32.totalorder %s394, %s396
      %p400 = scmp.eq.s32.totalorder %s40, 0
      %p401 = por %p399, %p400
      %p402 = scmp.ne.s32.totalorder %s394, %s396
      %p403 = scmp.eq.s32.totalorder %s45, 1
      %p404 = por %p402, %p403
      %p405 = scmp.ne.s32.totalorder %s396, %s397
      %p406 = scmp.eq.s32.totalorder %s45, 0
      %p407 = por %p405, %p406
      %p408 = scmp.ne.s32.totalorder %s396, %s397
      %p409 = scmp.eq.s32.totalorder %s46, 1
      %p410 = por %p408, %p409
      %p412 = scmp.ne.s32.totalorder %s397, %s411
      %p413 = scmp.eq.s32.totalorder %s46, 0
      %p414 = por %p412, %p413
      %s416 = sadd.s32 %s415, 1
      %p419 = scmp.eq.s32.totalorder %s40, 1
      %p420 = scmp.ne.s32.totalorder %s415, %s417
      %p421 = scmp.eq.s32.totalorder %s40, 0
      %p422 = por %p420, %p421
      %p423 = scmp.ne.s32.totalorder %s415, %s417
      %p424 = scmp.eq.s32.totalorder %s45, 1
      %p425 = por %p423, %p424
      %p426 = scmp.ne.s32.totalorder %s417, %s418
      %p427 = scmp.eq.s32.totalorder %s45, 0
      %p428 = por %p426, %p427
      %p429 = scmp.ne.s32.totalorder %s417, %s418
      %p430 = scmp.eq.s32.totalorder %s46, 1
      %p431 = por %p429, %p430
      %p433 = scmp.ne.s32.totalorder %s418, %s432
      %p434 = scmp.eq.s32.totalorder %s46, 0
      %p435 = por %p433, %p434
      %s437 = sadd.s32 %s436, 1
      %p440 = scmp.eq.s32.totalorder %s40, 1
      %p441 = scmp.ne.s32.totalorder %s436, %s438
      %p442 = scmp.eq.s32.totalorder %s40, 0
      %p443 = por %p441, %p442
      %p444 = scmp.ne.s32.totalorder %s436, %s438
      %p445 = scmp.eq.s32.totalorder %s45, 1
      %p446 = por %p444, %p445
      %p447 = scmp.ne.s32.totalorder %s438, %s439
      %p448 = scmp.eq.s32.totalorder %s45, 0
      %p449 = por %p447, %p448
      %p450 = scmp.ne.s32.totalorder %s438, %s439
      %p451 = scmp.eq.s32.totalorder %s46, 1
      %p452 = por %p450, %p451
      %p454 = scmp.ne.s32.totalorder %s439, %s453
      %p455 = scmp.eq.s32.totalorder %s46, 0
      %p456 = por %p454, %p455
      %s458 = sadd.s32 %s457, 1
      %p461 = scmp.eq.s32.totalorder %s40, 1
      %p462 = scmp.ne.s32.totalorder %s457, %s459
      %p463 = scmp.eq.s32.totalorder %s40, 0
      %p464 = por %p462, %p463
      %p465 = scmp.ne.s32.totalorder %s457, %s459
      %p466 = scmp.eq.s32.totalorder %s45, 1
      %p467 = por %p465, %p466
      %p468 = scmp.ne.s32.totalorder %s459, %s460
      %p469 = scmp.eq.s32.totalorder %s45, 0
      %p470 = por %p468, %p469
      %p471 = scmp.ne.s32.totalorder %s459, %s460
      %p472 = scmp.eq.s32.totalorder %s46, 1
      %p473 = por %p471, %p472
      %p475 = scmp.ne.s32.totalorder %s460, %s474
      %p476 = scmp.eq.s32.totalorder %s46, 0
      %p477 = por %p475, %p476
      %s479 = sadd.s32 %s478, 1
      %p482 = scmp.eq.s32.totalorder %s40, 1
      %p483 = scmp.ne.s32.totalorder %s478, %s480
      %p484 = scmp.eq.s32.totalorder %s40, 0
      %p485 = por %p483, %p484
      %p486 = scmp.ne.s32.totalorder %s478, %s480
      %p487 = scmp.eq.s32.totalorder %s45, 1
      %p488 = por %p486, %p487
      %p489 = scmp.ne.s32.totalorder %s480, %s481
      %p490 = scmp.eq.s32.totalorder %s45, 0
      %p491 = por %p489, %p490
      %p492 = scmp.ne.s32.totalorder %s480, %s481
      %p493 = scmp.eq.s32.totalorder %s46, 1
      %p494 = por %p492, %p493
      %p496 = scmp.ne.s32.totalorder %s481, %s495
      %p497 = scmp.eq.s32.totalorder %s46, 0
      %p498 = por %p496, %p497
      %s500 = sadd.s32 %s499, 1
      %p503 = scmp.eq.s32.totalorder %s40, 1
      %p504 = scmp.ne.s32.totalorder %s499, %s501
      %p505 = scmp.eq.s32.totalorder %s40, 0
      %p506 = por %p504, %p505
      %p507 = scmp.ne.s32.totalorder %s499, %s501
      %p508 = scmp.eq.s32.totalorder %s45, 1
      %p509 = por %p507, %p508
      %p510 = scmp.ne.s32.totalorder %s501, %s502
      %p511 = scmp.eq.s32.totalorder %s45, 0
      %p512 = por %p510, %p511
      %p513 = scmp.ne.s32.totalorder %s501, %s502
      %p514 = scmp.eq.s32.totalorder %s46, 1
      %p515 = por %p513, %p514
      %p517 = scmp.ne.s32.totalorder %s502, %s516
      %p518 = scmp.eq.s32.totalorder %s46, 0
      %p519 = por %p517, %p518
      %s521 = sadd.s32 %s520, 1
      %p524 = scmp.eq.s32.totalorder %s40, 1
      %p525 = scmp.ne.s32.totalorder %s520, %s522
      %p526 = scmp.eq.s32.totalorder %s40, 0
      %p527 = por %p525, %p526
      %p528 = scmp.ne.s32.totalorder %s520, %s522
      %p529 = scmp.eq.s32.totalorder %s45, 1
      %p530 = por %p528, %p529
      %p531 = scmp.ne.s32.totalorder %s522, %s523
      %p532 = scmp.eq.s32.totalorder %s45, 0
      %p533 = por %p531, %p532
      %p534 = scmp.ne.s32.totalorder %s522, %s523
      %p535 = scmp.eq.s32.totalorder %s46, 1
      %p536 = por %p534, %p535
      %p538 = scmp.ne.s32.totalorder %s523, %s537
      %p539 = scmp.eq.s32.totalorder %s46, 0
      %p540 = por %p538, %p539
      %s541 = ssub.s32 %s40, %s47
      %p542 = scmp.eq.s32.totalorder %s541, 0
      %s544 = sadd.s32 %s543, 1
      %s545 = scalar_select %p542, %s543, %s544
      %p548 = pneg %p542
      %p549 = scmp.eq.s32.totalorder %s40, 1
      %p550 = por %p548, %p549
      %p551 = scmp.ne.s32.totalorder %s543, %s546
      %p552 = scmp.eq.s32.totalorder %s40, 0
      %p553 = por %p551, %p552
      %p554 = scmp.ne.s32.totalorder %s543, %s546
      %p555 = scmp.eq.s32.totalorder %s45, 1
      %p556 = por %p554, %p555
      %p557 = scmp.ne.s32.totalorder %s546, %s547
      %p558 = scmp.eq.s32.totalorder %s45, 0
      %p559 = por %p557, %p558
      %p560 = scmp.ne.s32.totalorder %s546, %s547
      %p561 = scmp.eq.s32.totalorder %s46, 1
      %p562 = por %p560, %p561
      %p564 = scmp.ne.s32.totalorder %s547, %s563
      %p565 = scmp.eq.s32.totalorder %s46, 0
      %p566 = por %p564, %p565
      %p567 = scmp.le.s32.totalorder 1, %s40
      %p568 = scmp.lt.s32.totalorder %s40, 3
      %p569 = pnand %p567, %p568
      %p570 = pneg %p569
      // Predicated region
      $region9: #{tpu_custom_call.1} parent=5 // pred_check
        _
      $region10: #{tpu_custom_call.1} parent=5 // pred_check_branch
        %572 = sbr.rel (%p569) target = $region12
      $region11: #{tpu_custom_call.1} parent=5 // pred_region
        %s573 = ssub.s32 %s40, 1
        // Predicated region
        $region13: #{tpu_custom_call.1} parent=11 // pred_check
          %p574 = pneg %p113
        $region14: #{tpu_custom_call.1} parent=11 // pred_check_branch
          %576 = sbr.rel (%p574) target = $region16
        $region15: #{tpu_custom_call.1} parent=11 // pred_region
          %578 = vsyncadd [#allocation6], 0
          %s580 = sshll.u32 %s2, 4
          %s581 = int_to_ptr.hbm [resolvable:$true] %s580
          %s582 = sshll.u32 [#allocation7], 4
          %s583 = int_to_ptr.vmem [resolvable:$true] %s582
          %585 = dma.hbm_to_vmem [thread:$0]  %s581, 128, %s583, [#allocation6]
        $region16: #{tpu_custom_call.1} parent=11 // pred_fallthru
          _
        // Predicated region
        $region17: #{tpu_custom_call.1} parent=11 // pred_check
          %p586 = pneg %p134
        $region18: #{tpu_custom_call.1} parent=11 // pred_check_branch
          %588 = sbr.rel (%p586) target = $region20
        $region19: #{tpu_custom_call.1} parent=11 // pred_region
          _
        $region20: #{tpu_custom_call.1} parent=11 // pred_fallthru
          _
        // Predicated region
        $region21: #{tpu_custom_call.1} parent=11 // pred_check
          %p589 = pneg %p155
        $region22: #{tpu_custom_call.1} parent=11 // pred_check_branch
          %591 = sbr.rel (%p589) target = $region24
        $region23: #{tpu_custom_call.1} parent=11 // pred_region
          _
        $region24: #{tpu_custom_call.1} parent=11 // pred_fallthru
          _
        // Predicated region
        $region25: #{tpu_custom_call.1} parent=11 // pred_check
          %p592 = pneg %p176
        $region26: #{tpu_custom_call.1} parent=11 // pred_check_branch
          %594 = sbr.rel (%p592) target = $region28
        $region27: #{tpu_custom_call.1} parent=11 // pred_region
          _
        $region28: #{tpu_custom_call.1} parent=11 // pred_fallthru
          _
        // Predicated region
        $region29: #{tpu_custom_call.1} parent=11 // pred_check
          %p595 = pneg %p197
        $region30: #{tpu_custom_call.1} parent=11 // pred_check_branch
          %597 = sbr.rel (%p595) target = $region32
        $region31: #{tpu_custom_call.1} parent=11 // pred_region
          _
        $region32: #{tpu_custom_call.1} parent=11 // pred_fallthru
          _
        // Predicated region
        $region33: #{tpu_custom_call.1} parent=11 // pred_check
          %p598 = pneg %p218
        $region34: #{tpu_custom_call.1} parent=11 // pred_check_branch
          %600 = sbr.rel (%p598) target = $region36
        $region35: #{tpu_custom_call.1} parent=11 // pred_region
          _
        $region36: #{tpu_custom_call.1} parent=11 // pred_fallthru
          _
        // Predicated region
        $region37: #{tpu_custom_call.1} parent=11 // pred_check
          %p601 = pneg %p239
        $region38: #{tpu_custom_call.1} parent=11 // pred_check_branch
          %603 = sbr.rel (%p601) target = $region40
        $region39: #{tpu_custom_call.1} parent=11 // pred_region
          _
        $region40: #{tpu_custom_call.1} parent=11 // pred_fallthru
          _
        // Predicated region
        $region41: #{tpu_custom_call.1} parent=11 // pred_check
          %p604 = pneg %p260
        $region42: #{tpu_custom_call.1} parent=11 // pred_check_branch
          %606 = sbr.rel (%p604) target = $region44
        $region43: #{tpu_custom_call.1} parent=11 // pred_region
          %608 = vsyncadd [#allocation9], 0
          %s609 = sshll.u32 %s9, 4
          %s610 = int_to_ptr.hbm [resolvable:$true] %s609
          %s611 = sshll.u32 [#allocation8], 4
          %s612 = int_to_ptr.vmem [resolvable:$true] %s611
          %617 = dma.hbm_to_vmem [thread:$0]  %s610, 512, %s612, [#allocation9], 128, 128, 8
        $region44: #{tpu_custom_call.1} parent=11 // pred_fallthru
          _
        // Predicated region
        $region45: #{tpu_custom_call.1} parent=11 // pred_check
          %p618 = pneg %p281
        $region46: #{tpu_custom_call.1} parent=11 // pred_check_branch
          %620 = sbr.rel (%p618) target = $region48
        $region47: #{tpu_custom_call.1} parent=11 // pred_region
          _
        $region48: #{tpu_custom_call.1} parent=11 // pred_fallthru
          _
        // Predicated region
        $region49: #{tpu_custom_call.1} parent=11 // pred_check
          %p621 = pneg %p302
        $region50: #{tpu_custom_call.1} parent=11 // pred_check_branch
          %623 = sbr.rel (%p621) target = $region52
        $region51: #{tpu_custom_call.1} parent=11 // pred_region
          %625 = vsyncadd [#allocation9], 0
          %s626 = sshll.u32 %s11, 4
          %s627 = int_to_ptr.hbm [resolvable:$true] %s626
          %s628 = sshll.u32 [#allocation10], 4
          %s629 = int_to_ptr.vmem [resolvable:$true] %s628
          %634 = dma.hbm_to_vmem [thread:$0]  %s627, 512, %s629, [#allocation9], 128, 128, 8
        $region52: #{tpu_custom_call.1} parent=11 // pred_fallthru
          _
        // Predicated region
        $region53: #{tpu_custom_call.1} parent=11 // pred_check
          %p635 = pneg %p323
        $region54: #{tpu_custom_call.1} parent=11 // pred_check_branch
          %637 = sbr.rel (%p635) target = $region56
        $region55: #{tpu_custom_call.1} parent=11 // pred_region
          _
        $region56: #{tpu_custom_call.1} parent=11 // pred_fallthru
          _
        // Predicated region
        $region57: #{tpu_custom_call.1} parent=11 // pred_check
          %p638 = pneg %p344
        $region58: #{tpu_custom_call.1} parent=11 // pred_check_branch
          %640 = sbr.rel (%p638) target = $region60
        $region59: #{tpu_custom_call.1} parent=11 // pred_region
          %642 = vsyncadd [#allocation12], 0
          %s643 = sshll.u32 %s13, 4
          %s644 = int_to_ptr.hbm [resolvable:$true] %s643
          %s645 = sshll.u32 [#allocation11], 4
          %s646 = int_to_ptr.vmem [resolvable:$true] %s645
          %651 = dma.hbm_to_vmem [thread:$0]  %s644, 512, %s646, [#allocation12], 128, 128, 8
        $region60: #{tpu_custom_call.1} parent=11 // pred_fallthru
          _
        // Predicated region
        $region61: #{tpu_custom_call.1} parent=11 // pred_check
          %p652 = pneg %p365
        $region62: #{tpu_custom_call.1} parent=11 // pred_check_branch
          %654 = sbr.rel (%p652) target = $region64
        $region63: #{tpu_custom_call.1} parent=11 // pred_region
          _
        $region64: #{tpu_custom_call.1} parent=11 // pred_fallthru
          _
        // Predicated region
        $region65: #{tpu_custom_call.1} parent=11 // pred_check
          %p655 = pneg %p386
        $region66: #{tpu_custom_call.1} parent=11 // pred_check_branch
          %657 = sbr.rel (%p655) target = $region68
        $region67: #{tpu_custom_call.1} parent=11 // pred_region
          _
        $region68: #{tpu_custom_call.1} parent=11 // pred_fallthru
          _
        // Predicated region
        $region69: #{tpu_custom_call.1} parent=11 // pred_check
          %p658 = pneg %p407
        $region70: #{tpu_custom_call.1} parent=11 // pred_check_branch
          %660 = sbr.rel (%p658) target = $region72
        $region71: #{tpu_custom_call.1} parent=11 // pred_region
          _
        $region72: #{tpu_custom_call.1} parent=11 // pred_fallthru
          _
        // Predicated region
        $region73: #{tpu_custom_call.1} parent=11 // pred_check
          %p661 = pneg %p428
        $region74: #{tpu_custom_call.1} parent=11 // pred_check_branch
          %663 = sbr.rel (%p661) target = $region76
        $region75: #{tpu_custom_call.1} parent=11 // pred_region
          _
        $region76: #{tpu_custom_call.1} parent=11 // pred_fallthru
          _
        // Predicated region
        $region77: #{tpu_custom_call.1} parent=11 // pred_check
          %p664 = pneg %p449
        $region78: #{tpu_custom_call.1} parent=11 // pred_check_branch
          %666 = sbr.rel (%p664) target = $region80
        $region79: #{tpu_custom_call.1} parent=11 // pred_region
          _
        $region80: #{tpu_custom_call.1} parent=11 // pred_fallthru
          _
        // Predicated region
        $region81: #{tpu_custom_call.1} parent=11 // pred_check
          %p667 = pneg %p470
        $region82: #{tpu_custom_call.1} parent=11 // pred_check_branch
          %669 = sbr.rel (%p667) target = $region84
        $region83: #{tpu_custom_call.1} parent=11 // pred_region
          _
        $region84: #{tpu_custom_call.1} parent=11 // pred_fallthru
          _
        // Predicated region
        $region85: #{tpu_custom_call.1} parent=11 // pred_check
          %p670 = pneg %p491
        $region86: #{tpu_custom_call.1} parent=11 // pred_check_branch
          %672 = sbr.rel (%p670) target = $region88
        $region87: #{tpu_custom_call.1} parent=11 // pred_region
          _
        $region88: #{tpu_custom_call.1} parent=11 // pred_fallthru
          _
        // Predicated region
        $region89: #{tpu_custom_call.1} parent=11 // pred_check
          %p673 = pneg %p512
        $region90: #{tpu_custom_call.1} parent=11 // pred_check_branch
          %675 = sbr.rel (%p673) target = $region92
        $region91: #{tpu_custom_call.1} parent=11 // pred_region
          _
        $region92: #{tpu_custom_call.1} parent=11 // pred_fallthru
          _
        // Predicated region
        $region93: #{tpu_custom_call.1} parent=11 // pred_check
          %p676 = pneg %p533
        $region94: #{tpu_custom_call.1} parent=11 // pred_check_branch
          %678 = sbr.rel (%p676) target = $region96
        $region95: #{tpu_custom_call.1} parent=11 // pred_region
          _
        $region96: #{tpu_custom_call.1} parent=11 // pred_fallthru
          _
      $region12: #{tpu_custom_call.1} parent=5 // pred_fallthru
        _
      %p679 = scmp.lt.s32.totalorder %s40, 2
      // Predicated region
      $region97: #{tpu_custom_call.1} parent=5 // pred_check
        %p680 = pneg %p679
      $region98: #{tpu_custom_call.1} parent=5 // pred_check_branch
        %682 = sbr.rel (%p680) target = $region100
      $region99: #{tpu_custom_call.1} parent=5 // pred_region
        // Predicated region
        $region101: #{tpu_custom_call.1} parent=99 // pred_check
          %p683 = pneg %p60
        $region102: #{tpu_custom_call.1} parent=99 // pred_check_branch
          %685 = sbr.rel (%p683) target = $region104
        $region103: #{tpu_custom_call.1} parent=99 // pred_region
          %s686 = sand.u32 %s50, 1
          %s687 = scalar_lea.sflag [#allocation3], %s686
          %s688 = sand.u32 %s50, 1
          %s689 = smul.addr %s688, 8
          %s690 = scalar_lea.vmem [#allocation2], %s689
          %692 = vsyncadd %s687, 0
          %s693 = smul.addr %s40, 8
          %s694 = scalar_lea.hbm %s0, %s693
          %s696 = sshll.u32 %s694, 4
          %s697 = int_to_ptr.hbm [resolvable:$true] %s696
          %s698 = sshll.u32 %s690, 4
          %s699 = int_to_ptr.vmem [resolvable:$true] %s698
          %701 = dma.hbm_to_vmem [thread:$0]  %s697, 128, %s699, %s687
        $region104: #{tpu_custom_call.1} parent=99 // pred_fallthru
          _
        // Predicated region
        $region105: #{tpu_custom_call.1} parent=99 // pred_check
          %p702 = pneg %p86
        $region106: #{tpu_custom_call.1} parent=99 // pred_check_branch
          %704 = sbr.rel (%p702) target = $region108
        $region107: #{tpu_custom_call.1} parent=99 // pred_region
          %s705 = sand.u32 %s40, 1
          %s706 = scalar_lea.sflag [#allocation6], %s705
          %s707 = sand.u32 %s76, 1
          %s708 = smul.addr %s707, 8
          %s709 = scalar_lea.vmem [#allocation5], %s708
          %711 = vsyncadd %s706, 0
          %s712 = smul.addr %s40, 8
          %s713 = scalar_lea.hbm %s1, %s712
          %s715 = sshll.u32 %s713, 4
          %s716 = int_to_ptr.hbm [resolvable:$true] %s715
          %s717 = sshll.u32 %s709, 4
          %s718 = int_to_ptr.vmem [resolvable:$true] %s717
          %720 = dma.hbm_to_vmem [thread:$0]  %s716, 128, %s718, %s706
        $region108: #{tpu_custom_call.1} parent=99 // pred_fallthru
          _
      $region100: #{tpu_custom_call.1} parent=5 // pred_fallthru
        _
      %p721 = scmp.le.s32.totalorder 1, %s40
      %p722 = scmp.lt.s32.totalorder %s40, 3
      %p723 = pnand %p721, %p722
      %p724 = pneg %p723
      // Predicated region
      $region109: #{tpu_custom_call.1} parent=5 // pred_check
        _
      $region110: #{tpu_custom_call.1} parent=5 // pred_check_branch
        %726 = sbr.rel (%p723) target = $region112
      $region111: #{tpu_custom_call.1} parent=5 // pred_region
        %s727 = ssub.s32 %s40, 1
        %s728 = sand.u32 %s53, 1
        %s729 = scalar_lea.sflag [#allocation3], %s728
        %s730 = sand.u32 %s53, 1
        %s731 = smul.addr %s730, 8
        %s732 = scalar_lea.vmem [#allocation2], %s731
        // Predicated region
        $region113: #{tpu_custom_call.1} parent=111 // pred_check
          %p733 = pneg %p66
        $region114: #{tpu_custom_call.1} parent=111 // pred_check_branch
          %735 = sbr.rel (%p733) target = $region116
        $region115: #{tpu_custom_call.1} parent=111 // pred_region
          %737 = dma.done %s729, 128
        $region116: #{tpu_custom_call.1} parent=111 // pred_fallthru
          _
        %s738 = sand.u32 %s45, 1
        %s739 = scalar_lea.sflag [#allocation6], %s738
        %s740 = sand.u32 %s79, 1
        %s741 = smul.addr %s740, 8
        %s742 = scalar_lea.vmem [#allocation5], %s741
        // Predicated region
        $region117: #{tpu_custom_call.1} parent=111 // pred_check
          %p743 = pneg %p92
        $region118: #{tpu_custom_call.1} parent=111 // pred_check_branch
          %745 = sbr.rel (%p743) target = $region120
        $region119: #{tpu_custom_call.1} parent=111 // pred_region
          %747 = dma.done %s739, 128
        $region120: #{tpu_custom_call.1} parent=111 // pred_fallthru
          _
        // Predicated region
        $region121: #{tpu_custom_call.1} parent=111 // pred_check
          %p748 = pneg %p113
        $region122: #{tpu_custom_call.1} parent=111 // pred_check_branch
          %750 = sbr.rel (%p748) target = $region124
        $region123: #{tpu_custom_call.1} parent=111 // pred_region
          %752 = dma.done [#allocation6], 128
        $region124: #{tpu_custom_call.1} parent=111 // pred_fallthru
          _
        // Predicated region
        $region125: #{tpu_custom_call.1} parent=111 // pred_check
          %p753 = pneg %p260
        $region126: #{tpu_custom_call.1} parent=111 // pred_check_branch
          %755 = sbr.rel (%p753) target = $region128
        $region127: #{tpu_custom_call.1} parent=111 // pred_region
          %757 = dma.done [#allocation9], 512
        $region128: #{tpu_custom_call.1} parent=111 // pred_fallthru
          _
        // Predicated region
        $region129: #{tpu_custom_call.1} parent=111 // pred_check
          %p758 = pneg %p302
        $region130: #{tpu_custom_call.1} parent=111 // pred_check_branch
          %760 = sbr.rel (%p758) target = $region132
        $region131: #{tpu_custom_call.1} parent=111 // pred_region
          %762 = dma.done [#allocation9], 512
        $region132: #{tpu_custom_call.1} parent=111 // pred_fallthru
          _
        // Predicated region
        $region133: #{tpu_custom_call.1} parent=111 // pred_check
          %p763 = pneg %p344
        $region134: #{tpu_custom_call.1} parent=111 // pred_check_branch
          %765 = sbr.rel (%p763) target = $region136
        $region135: #{tpu_custom_call.1} parent=111 // pred_region
          %767 = dma.done [#allocation12], 512
        $region136: #{tpu_custom_call.1} parent=111 // pred_fallthru
          _
        %s768 = sand.u32 %s53, 1
        %s769 = scalar_lea.sflag [#allocation3], %s768
        %s770 = sand.u32 %s53, 1
        %s771 = smul.addr %s770, 8
        %s772 = scalar_lea.vmem [#allocation2], %s771
        %p773 = pneg %p66
        %p774 = pneg %p63
        %s775 = sand.u32 %s45, 1
        %s776 = scalar_lea.sflag [#allocation6], %s775
        %s777 = sand.u32 %s79, 1
        %s778 = smul.addr %s777, 8
        %s779 = scalar_lea.vmem [#allocation5], %s778
        %p780 = pneg %p92
        %p781 = pneg %p89
        %p782 = pneg %p113
        %p783 = pneg %p110
        %p784 = pneg %p134
        %p785 = pneg %p131
        %p786 = pneg %p155
        %p787 = pneg %p152
        %p788 = pneg %p176
        %p789 = pneg %p173
        %p790 = pneg %p197
        %p791 = pneg %p194
        %p792 = pneg %p218
        %p793 = pneg %p215
        %p794 = pneg %p239
        %p795 = pneg %p236
        %p796 = pneg %p260
        %p797 = pneg %p257
        %p798 = pneg %p281
        %p799 = pneg %p278
        %p800 = pneg %p302
        %p801 = pneg %p299
        %p802 = pneg %p323
        %p803 = pneg %p320
        %p804 = pneg %p344
        %p805 = pneg %p341
        %p806 = pneg %p365
        %p807 = pneg %p362
        %p808 = pneg %p386
        %p809 = pneg %p383
        %p810 = pneg %p407
        %p811 = pneg %p404
        %p812 = pneg %p428
        %p813 = pneg %p425
        %p814 = pneg %p449
        %p815 = pneg %p446
        %p816 = pneg %p470
        %p817 = pneg %p467
        %p818 = pneg %p491
        %p819 = pneg %p488
        %p820 = pneg %p512
        %p821 = pneg %p509
        %p822 = pneg %p533
        %p823 = pneg %p530
        %p824 = pneg %p559
        %p825 = pneg %p556
        %s826 = sand.u32 %s546, 1
        %s827 = scalar_lea.sflag [#allocation4], %s826
        %s828 = sand.u32 %s546, 1
        %s829 = smul.addr %s828, 8
        %s830 = scalar_lea.vmem [#allocation13], %s829
        %v831 = vld [vmem:[%s732] sm:$0xff]
        %v832 = vld [vmem:[%s742] sm:$0xff]
        %v833 = vld [vmem:[#allocation7] sm:$0xff]
        %v834 = vld [vmem:[%s3] sm:$0xff]
        %v835 = vld [vmem:[%s3 + $0x8] sm:$0xff]
        %v836 = vld [vmem:[%s3 + $0x10] sm:$0xff]
        %v837 = vld [vmem:[%s3 + $0x18] sm:$0xff]
        %v838 = vld [vmem:[%s4] sm:$0x1]
        %v840 = vperm.slane %v838, 0
        %vm842 = vcmask 261120
        %v844 = vsel %vm842, %v831, 0
        %846 = vmatpush.msra.mxu0 0.0
        %847 = vmatpush.msra.mxu0 0.0
        %848 = vmatpush.msra.mxu0 0.0
        %849 = vmatpush.msra.mxu0 0.0
        %850 = vmatpush.msra.mxu0 0.0
        %851 = vmatpush.msra.mxu0 0.0
        %852 = vmatpush.msra.mxu0 0.0
        %853 = vmatpush.msra.mxu0 0.0
        %854 = vmatpush.msra.mxu0 0.0
        %855 = vmatpush.msra.mxu0 0.0
        %856 = vmatpush.msra.mxu0 0.0
        %857 = vmatpush.msra.mxu0 0.0
        %858 = vmatpush.msra.mxu0 %v837
        %859 = vmatpush.msra.mxu0 %v836
        %860 = vmatpush.msra.mxu0 %v835
        %861 = vmatpush.msra.mxu0 %v834
        %862 = vmatmul.f32.gmra.mxu0 %v844
        %v863 = vpop.f32.mrf.mxu0
        %v864 = vadd.f32 %v840, %v863
        %865 = vdwg.mxu0
        %v866 = vld [vmem:[%s5] sm:$0xff]
        %v867 = vld [vmem:[%s5 + $0x8] sm:$0xff]
        %v868 = vld [vmem:[%s5 + $0x10] sm:$0xff]
        %v869 = vld [vmem:[%s5 + $0x18] sm:$0xff]
        %871 = vrot.lane.b32.xlu0 %v864, 96
        %v872 = vpop.permute.xlu0 %871
        %vm873 = vcmask 64512
        %v874 = vsel %vm873, %v864, 0
        %v876 = vsel %vm873, %v872, 0
        %878 = vmatpush.xpose.msra.mxu0 0.0
        %879 = vmatpush.xpose.msra.mxu0 0.0
        %880 = vmatpush.xpose.msra.mxu0 0.0
        %881 = vmatpush.xpose.msra.mxu0 0.0
        %882 = vmatpush.xpose.msra.mxu0 0.0
        %883 = vmatpush.xpose.msra.mxu0 0.0
        %884 = vmatpush.xpose.msra.mxu0 0.0
        %885 = vmatpush.xpose.msra.mxu0 0.0
        %886 = vmatpush.xpose.msra.mxu0 0.0
        %887 = vmatpush.xpose.msra.mxu0 0.0
        %888 = vmatpush.xpose.msra.mxu0 0.0
        %889 = vmatpush.xpose.msra.mxu0 0.0
        %890 = vmatpush.xpose.msra.mxu0 0.0
        %891 = vmatpush.xpose.msra.mxu0 0.0
        %892 = vmatpush.xpose.msra.mxu0 0.0
        %893 = vmatpush.xpose.msra.mxu0 %v876
        %894 = vmatmul.f32.gmra.mxu0 %v874
        %v895 = vpop.f32.mrf.mxu0
        %v896 = vadd.f32 0.0, %v895
        %897 = vdwg.mxu0
        %v898 = vmul.f32 %v896, 0.35355338
        %v899 = vadd.f32 %v898, %v833
        %v900 = vsel %vm873, %v899, -inf
        %901 = vmax.xlane.f32.xlu0 %v900
        %v902 = vpop.xlane.xlu0 %901
        %v903 = vsub.f32 %v899, %v902
        %v904 = vmul.f32 %v903, 1.442695
        %v905 = vpow.pop %v904
        %v906 = vsel %vm873, %v905, 0.0
        %907 = vadd.xlane.f32.xlu0 %v906
        %v908 = vpop.xlane.xlu0 %907
        %v909 = vrcp.pop %v908
        %v910 = vmul.f32 %v905, %v909
        %911 = vrot.lane.b32.xlu0 %v864, 64
        %v912 = vpop.permute.xlu0 %911
        %v915 = vsel %vm873, %v910, 0
        %917 = vmatpush.msra.mxu0 0.0
        %918 = vmatpush.msra.mxu0 0.0
        %919 = vmatpush.msra.mxu0 0.0
        %920 = vmatpush.msra.mxu0 0.0
        %921 = vmatpush.msra.mxu0 0.0
        %922 = vmatpush.msra.mxu0 0.0
        %923 = vmatpush.msra.mxu0 0.0
        %924 = vmatpush.msra.mxu0 0.0
        %925 = vmatpush.msra.mxu0 0.0
        %926 = vmatpush.msra.mxu0 0.0
        %927 = vmatpush.msra.mxu0 0.0
        %928 = vmatpush.msra.mxu0 0.0
        %929 = vmatpush.msra.mxu0 0.0
        %930 = vmatpush.msra.mxu0 0.0
        %931 = vmatpush.msra.mxu0 0.0
        %932 = vmatpush.msra.mxu0 %v912
        %933 = vmatmul.f32.gmra.mxu0 %v915
        %v934 = vpop.f32.mrf.mxu0
        %v935 = vadd.f32 0.0, %v934
        %936 = vdwg.mxu0
        %937 = vrot.lane.b32.xlu0 %v864, 120
        %v938 = vpop.permute.xlu0 %937
        %939 = vrot.lane.b32.xlu0 %v864, 88
        %v940 = vpop.permute.xlu0 %939
        %v941 = vsel %vm873, %v938, 0
        %v943 = vsel %vm873, %v940, 0
        %945 = vmatpush.xpose.msra.mxu0 0.0
        %946 = vmatpush.xpose.msra.mxu0 0.0
        %947 = vmatpush.xpose.msra.mxu0 0.0
        %948 = vmatpush.xpose.msra.mxu0 0.0
        %949 = vmatpush.xpose.msra.mxu0 0.0
        %950 = vmatpush.xpose.msra.mxu0 0.0
        %951 = vmatpush.xpose.msra.mxu0 0.0
        %952 = vmatpush.xpose.msra.mxu0 0.0
        %953 = vmatpush.xpose.msra.mxu0 0.0
        %954 = vmatpush.xpose.msra.mxu0 0.0
        %955 = vmatpush.xpose.msra.mxu0 0.0
        %956 = vmatpush.xpose.msra.mxu0 0.0
        %957 = vmatpush.xpose.msra.mxu0 0.0
        %958 = vmatpush.xpose.msra.mxu0 0.0
        %959 = vmatpush.xpose.msra.mxu0 0.0
        %960 = vmatpush.xpose.msra.mxu0 %v943
        %961 = vmatmul.f32.gmra.mxu0 %v941
        %v962 = vpop.f32.mrf.mxu0
        %v963 = vadd.f32 0.0, %v962
        %964 = vdwg.mxu0
        %v965 = vmul.f32 %v963, 0.35355338
        %v966 = vadd.f32 %v965, %v833
        %v967 = vsel %vm873, %v966, -inf
        %968 = vmax.xlane.f32.xlu0 %v967
        %v969 = vpop.xlane.xlu0 %968
        %v970 = vsub.f32 %v966, %v969
        %v971 = vmul.f32 %v970, 1.442695
        %v972 = vpow.pop %v971
        %v973 = vsel %vm873, %v972, 0.0
        %974 = vadd.xlane.f32.xlu0 %v973
        %v975 = vpop.xlane.xlu0 %974
        %v976 = vrcp.pop %v975
        %v977 = vmul.f32 %v972, %v976
        %978 = vrot.lane.b32.xlu0 %v864, 56
        %v979 = vpop.permute.xlu0 %978
        %v982 = vsel %vm873, %v977, 0
        %984 = vmatpush.msra.mxu0 0.0
        %985 = vmatpush.msra.mxu0 0.0
        %986 = vmatpush.msra.mxu0 0.0
        %987 = vmatpush.msra.mxu0 0.0
        %988 = vmatpush.msra.mxu0 0.0
        %989 = vmatpush.msra.mxu0 0.0
        %990 = vmatpush.msra.mxu0 0.0
        %991 = vmatpush.msra.mxu0 0.0
        %992 = vmatpush.msra.mxu0 0.0
        %993 = vmatpush.msra.mxu0 0.0
        %994 = vmatpush.msra.mxu0 0.0
        %995 = vmatpush.msra.mxu0 0.0
        %996 = vmatpush.msra.mxu0 0.0
        %997 = vmatpush.msra.mxu0 0.0
        %998 = vmatpush.msra.mxu0 0.0
        %999 = vmatpush.msra.mxu0 %v979
        %1000 = vmatmul.f32.gmra.mxu0 %v982
        %v1001 = vpop.f32.mrf.mxu0
        %v1002 = vadd.f32 0.0, %v1001
        %1003 = vdwg.mxu0
        %v1005 = vsel %vm873, %v1002, 0
        %1007 = vmatpush.msra.mxu0 0.0
        %1008 = vmatpush.msra.mxu0 0.0
        %1009 = vmatpush.msra.mxu0 0.0
        %1010 = vmatpush.msra.mxu0 0.0
        %1011 = vmatpush.msra.mxu0 0.0
        %1012 = vmatpush.msra.mxu0 0.0
        %1013 = vmatpush.msra.mxu0 0.0
        %1014 = vmatpush.msra.mxu0 0.0
        %1015 = vmatpush.msra.mxu0 0.0
        %1016 = vmatpush.msra.mxu0 0.0
        %1017 = vmatpush.msra.mxu0 0.0
        %1018 = vmatpush.msra.mxu0 0.0
        %1019 = vmatpush.msra.mxu0 0.0
        %1020 = vmatpush.msra.mxu0 0.0
        %1021 = vmatpush.msra.mxu0 0.0
        %1022 = vmatpush.msra.mxu0 %v867
        %1023 = vmatmul.f32.gmra.mxu0 %v1005
        %v1024 = vpop.f32.mrf.mxu0
        %v1025 = vadd.f32 0.0, %v1024
        %1026 = vdwg.mxu0
        %v1028 = vsel %vm873, %v935, 0
        %1030 = vmatpush.msra.mxu0 0.0
        %1031 = vmatpush.msra.mxu0 0.0
        %1032 = vmatpush.msra.mxu0 0.0
        %1033 = vmatpush.msra.mxu0 0.0
        %1034 = vmatpush.msra.mxu0 0.0
        %1035 = vmatpush.msra.mxu0 0.0
        %1036 = vmatpush.msra.mxu0 0.0
        %1037 = vmatpush.msra.mxu0 0.0
        %1038 = vmatpush.msra.mxu0 0.0
        %1039 = vmatpush.msra.mxu0 0.0
        %1040 = vmatpush.msra.mxu0 0.0
        %1041 = vmatpush.msra.mxu0 0.0
        %1042 = vmatpush.msra.mxu0 0.0
        %1043 = vmatpush.msra.mxu0 0.0
        %1044 = vmatpush.msra.mxu0 0.0
        %1045 = vmatpush.msra.mxu0 %v866
        %1046 = vmatmul.f32.gmra.mxu0 %v1028
        %v1047 = vpop.f32.mrf.mxu0
        %v1048 = vadd.f32 %v1025, %v1047
        %1049 = vdwg.mxu0
        %1050 = vrot.lane.b32.xlu0 %v864, 112
        %v1051 = vpop.permute.xlu0 %1050
        %1052 = vrot.lane.b32.xlu0 %v864, 80
        %v1053 = vpop.permute.xlu0 %1052
        %v1054 = vsel %vm873, %v1051, 0
        %v1056 = vsel %vm873, %v1053, 0
        %1058 = vmatpush.xpose.msra.mxu0 0.0
        %1059 = vmatpush.xpose.msra.mxu0 0.0
        %1060 = vmatpush.xpose.msra.mxu0 0.0
        %1061 = vmatpush.xpose.msra.mxu0 0.0
        %1062 = vmatpush.xpose.msra.mxu0 0.0
        %1063 = vmatpush.xpose.msra.mxu0 0.0
        %1064 = vmatpush.xpose.msra.mxu0 0.0
        %1065 = vmatpush.xpose.msra.mxu0 0.0
        %1066 = vmatpush.xpose.msra.mxu0 0.0
        %1067 = vmatpush.xpose.msra.mxu0 0.0
        %1068 = vmatpush.xpose.msra.mxu0 0.0
        %1069 = vmatpush.xpose.msra.mxu0 0.0
        %1070 = vmatpush.xpose.msra.mxu0 0.0
        %1071 = vmatpush.xpose.msra.mxu0 0.0
        %1072 = vmatpush.xpose.msra.mxu0 0.0
        %1073 = vmatpush.xpose.msra.mxu0 %v1056
        %1074 = vmatmul.f32.gmra.mxu0 %v1054
        %v1075 = vpop.f32.mrf.mxu0
        %v1076 = vadd.f32 0.0, %v1075
        %1077 = vdwg.mxu0
        %v1078 = vmul.f32 %v1076, 0.35355338
        %v1079 = vadd.f32 %v1078, %v833
        %v1080 = vsel %vm873, %v1079, -inf
        %1081 = vmax.xlane.f32.xlu0 %v1080
        %v1082 = vpop.xlane.xlu0 %1081
        %v1083 = vsub.f32 %v1079, %v1082
        %v1084 = vmul.f32 %v1083, 1.442695
        %v1085 = vpow.pop %v1084
        %v1086 = vsel %vm873, %v1085, 0.0
        %1087 = vadd.xlane.f32.xlu0 %v1086
        %v1088 = vpop.xlane.xlu0 %1087
        %v1089 = vrcp.pop %v1088
        %v1090 = vmul.f32 %v1085, %v1089
        %1091 = vrot.lane.b32.xlu0 %v864, 48
        %v1092 = vpop.permute.xlu0 %1091
        %v1095 = vsel %vm873, %v1090, 0
        %1097 = vmatpush.msra.mxu0 0.0
        %1098 = vmatpush.msra.mxu0 0.0
        %1099 = vmatpush.msra.mxu0 0.0
        %1100 = vmatpush.msra.mxu0 0.0
        %1101 = vmatpush.msra.mxu0 0.0
        %1102 = vmatpush.msra.mxu0 0.0
        %1103 = vmatpush.msra.mxu0 0.0
        %1104 = vmatpush.msra.mxu0 0.0
        %1105 = vmatpush.msra.mxu0 0.0
        %1106 = vmatpush.msra.mxu0 0.0
        %1107 = vmatpush.msra.mxu0 0.0
        %1108 = vmatpush.msra.mxu0 0.0
        %1109 = vmatpush.msra.mxu0 0.0
        %1110 = vmatpush.msra.mxu0 0.0
        %1111 = vmatpush.msra.mxu0 0.0
        %1112 = vmatpush.msra.mxu0 %v1092
        %1113 = vmatmul.f32.gmra.mxu0 %v1095
        %v1114 = vpop.f32.mrf.mxu0
        %v1115 = vadd.f32 0.0, %v1114
        %1116 = vdwg.mxu0
        %v1118 = vsel %vm873, %v1115, 0
        %1120 = vmatpush.msra.mxu0 0.0
        %1121 = vmatpush.msra.mxu0 0.0
        %1122 = vmatpush.msra.mxu0 0.0
        %1123 = vmatpush.msra.mxu0 0.0
        %1124 = vmatpush.msra.mxu0 0.0
        %1125 = vmatpush.msra.mxu0 0.0
        %1126 = vmatpush.msra.mxu0 0.0
        %1127 = vmatpush.msra.mxu0 0.0
        %1128 = vmatpush.msra.mxu0 0.0
        %1129 = vmatpush.msra.mxu0 0.0
        %1130 = vmatpush.msra.mxu0 0.0
        %1131 = vmatpush.msra.mxu0 0.0
        %1132 = vmatpush.msra.mxu0 0.0
        %1133 = vmatpush.msra.mxu0 0.0
        %1134 = vmatpush.msra.mxu0 0.0
        %1135 = vmatpush.msra.mxu0 %v868
        %1136 = vmatmul.f32.gmra.mxu0 %v1118
        %v1137 = vpop.f32.mrf.mxu0
        %v1138 = vadd.f32 0.0, %v1137
        %1139 = vdwg.mxu0
        %v1140 = vadd.f32 %v1048, %v1138
        %1141 = vrot.lane.b32.xlu0 %v864, 104
        %v1142 = vpop.permute.xlu0 %1141
        %1143 = vrot.lane.b32.xlu0 %v864, 72
        %v1144 = vpop.permute.xlu0 %1143
        %v1145 = vsel %vm873, %v1142, 0
        %v1147 = vsel %vm873, %v1144, 0
        %1149 = vmatpush.xpose.msra.mxu0 0.0
        %1150 = vmatpush.xpose.msra.mxu0 0.0
        %1151 = vmatpush.xpose.msra.mxu0 0.0
        %1152 = vmatpush.xpose.msra.mxu0 0.0
        %1153 = vmatpush.xpose.msra.mxu0 0.0
        %1154 = vmatpush.xpose.msra.mxu0 0.0
        %1155 = vmatpush.xpose.msra.mxu0 0.0
        %1156 = vmatpush.xpose.msra.mxu0 0.0
        %1157 = vmatpush.xpose.msra.mxu0 0.0
        %1158 = vmatpush.xpose.msra.mxu0 0.0
        %1159 = vmatpush.xpose.msra.mxu0 0.0
        %1160 = vmatpush.xpose.msra.mxu0 0.0
        %1161 = vmatpush.xpose.msra.mxu0 0.0
        %1162 = vmatpush.xpose.msra.mxu0 0.0
        %1163 = vmatpush.xpose.msra.mxu0 0.0
        %1164 = vmatpush.xpose.msra.mxu0 %v1147
        %1165 = vmatmul.f32.gmra.mxu0 %v1145
        %v1166 = vpop.f32.mrf.mxu0
        %v1167 = vadd.f32 0.0, %v1166
        %1168 = vdwg.mxu0
        %v1169 = vmul.f32 %v1167, 0.35355338
        %v1170 = vadd.f32 %v1169, %v833
        %v1171 = vsel %vm873, %v1170, -inf
        %1172 = vmax.xlane.f32.xlu0 %v1171
        %v1173 = vpop.xlane.xlu0 %1172
        %v1174 = vsub.f32 %v1170, %v1173
        %v1175 = vmul.f32 %v1174, 1.442695
        %v1176 = vpow.pop %v1175
        %v1177 = vsel %vm873, %v1176, 0.0
        %1178 = vadd.xlane.f32.xlu0 %v1177
        %v1179 = vpop.xlane.xlu0 %1178
        %v1180 = vrcp.pop %v1179
        %v1181 = vmul.f32 %v1176, %v1180
        %1182 = vrot.lane.b32.xlu0 %v864, 40
        %v1183 = vpop.permute.xlu0 %1182
        %v1186 = vsel %vm873, %v1181, 0
        %1188 = vmatpush.msra.mxu0 0.0
        %1189 = vmatpush.msra.mxu0 0.0
        %1190 = vmatpush.msra.mxu0 0.0
        %1191 = vmatpush.msra.mxu0 0.0
        %1192 = vmatpush.msra.mxu0 0.0
        %1193 = vmatpush.msra.mxu0 0.0
        %1194 = vmatpush.msra.mxu0 0.0
        %1195 = vmatpush.msra.mxu0 0.0
        %1196 = vmatpush.msra.mxu0 0.0
        %1197 = vmatpush.msra.mxu0 0.0
        %1198 = vmatpush.msra.mxu0 0.0
        %1199 = vmatpush.msra.mxu0 0.0
        %1200 = vmatpush.msra.mxu0 0.0
        %1201 = vmatpush.msra.mxu0 0.0
        %1202 = vmatpush.msra.mxu0 0.0
        %1203 = vmatpush.msra.mxu0 %v1183
        %1204 = vmatmul.f32.gmra.mxu0 %v1186
        %v1205 = vpop.f32.mrf.mxu0
        %v1206 = vadd.f32 0.0, %v1205
        %1207 = vdwg.mxu0
        %v1209 = vsel %vm873, %v1206, 0
        %1211 = vmatpush.msra.mxu0 0.0
        %1212 = vmatpush.msra.mxu0 0.0
        %1213 = vmatpush.msra.mxu0 0.0
        %1214 = vmatpush.msra.mxu0 0.0
        %1215 = vmatpush.msra.mxu0 0.0
        %1216 = vmatpush.msra.mxu0 0.0
        %1217 = vmatpush.msra.mxu0 0.0
        %1218 = vmatpush.msra.mxu0 0.0
        %1219 = vmatpush.msra.mxu0 0.0
        %1220 = vmatpush.msra.mxu0 0.0
        %1221 = vmatpush.msra.mxu0 0.0
        %1222 = vmatpush.msra.mxu0 0.0
        %1223 = vmatpush.msra.mxu0 0.0
        %1224 = vmatpush.msra.mxu0 0.0
        %1225 = vmatpush.msra.mxu0 0.0
        %1226 = vmatpush.msra.mxu0 %v869
        %1227 = vmatmul.f32.gmra.mxu0 %v1209
        %v1228 = vpop.f32.mrf.mxu0
        %v1229 = vadd.f32 0.0, %v1228
        %1230 = vdwg.mxu0
        %v1231 = vadd.f32 %v1140, %v1229
        %v1232 = vld [vmem:[%s6] sm:$0x1]
        %v1234 = vperm.slane %v1232, 0
        %v1236 = vadd.f32 %v1231, %v1234
        %v1237 = vadd.f32 %v831, %v1236
        %v1238 = vld [vmem:[%s17] sm:$0x1]
        %v1239 = vld [vmem:[%s18] sm:$0x1]
        %v1240 = vsel %vm842, %v1237, 0.0
        %1241 = vadd.xlane.f32.xlu0 %v1240
        %v1242 = vpop.xlane.xlu0 %1241
        %v1243 = vrcp.pop 32.0
        %v1244 = vmul.f32 32.0, %v1243
        %v1245 = vsub.f32 1.0, %v1244
        %v1246 = vmul.f32 %v1243, %v1245
        %v1247 = vadd.f32 %v1243, %v1246
        %vm1248 = vweird.f32 %v1243
        %v1249 = vsel %vm1248, %v1243, %v1247
        %v1250 = vmul.f32 %v1242, %v1249
        %v1251 = vsub.f32 %v1237, %v1250
        %v1252 = vmul.f32 %v1251, %v1251
        %v1253 = vsel %vm842, %v1252, 0.0
        %1254 = vadd.xlane.f32.xlu0 %v1253
        %v1255 = vpop.xlane.xlu0 %1254
        %v1256 = vmul.f32 %v1255, %v1249
        %v1257 = vadd.f32 %v1256, 1e-05
        %v1258 = vrsqrt.pop %v1257
        %v1259 = vmul.f32 %v1258, %v1257
        %v1260 = vmul.f32 %v1259, %v1258
        %v1261 = vmul.f32 0.5, %v1260
        %v1262 = vsub.f32 1.5, %v1261
        %v1263 = vmul.f32 %v1258, %v1262
        %vm1264 = vweird.f32 %v1257
        %vm1265 = vweird.f32 %v1258
        %vm1266 = vmor %vm1264, %vm1265
        %v1267 = vsel %vm1266, %v1258, %v1263
        %v1268 = vmul.f32 %v1251, %v1267
        %v1270 = vperm.slane %v1238, 0
        %v1272 = vmul.f32 %v1268, %v1270
        %v1274 = vperm.slane %v1239, 0
        %v1276 = vadd.f32 %v1272, %v1274
        %v1277 = vld [vmem:[%s7] sm:$0xff]
        %v1278 = vld [vmem:[%s7 + $0x8] sm:$0xff]
        %v1279 = vld [vmem:[%s7 + $0x10] sm:$0xff]
        %v1280 = vld [vmem:[%s7 + $0x18] sm:$0xff]
        %v1281 = vld [vmem:[%s8] sm:$0x1]
        %v1283 = vperm.slane %v1281, 0
        %v1286 = vsel %vm842, %v1276, 0
        %1288 = vmatpush.msra.mxu0 0.0
        %1289 = vmatpush.msra.mxu0 0.0
        %1290 = vmatpush.msra.mxu0 0.0
        %1291 = vmatpush.msra.mxu0 0.0
        %1292 = vmatpush.msra.mxu0 0.0
        %1293 = vmatpush.msra.mxu0 0.0
        %1294 = vmatpush.msra.mxu0 0.0
        %1295 = vmatpush.msra.mxu0 0.0
        %1296 = vmatpush.msra.mxu0 0.0
        %1297 = vmatpush.msra.mxu0 0.0
        %1298 = vmatpush.msra.mxu0 0.0
        %1299 = vmatpush.msra.mxu0 0.0
        %1300 = vmatpush.msra.mxu0 %v1280
        %1301 = vmatpush.msra.mxu0 %v1279
        %1302 = vmatpush.msra.mxu0 %v1278
        %1303 = vmatpush.msra.mxu0 %v1277
        %1304 = vmatmul.f32.gmra.mxu0 %v1286
        %v1305 = vpop.f32.mrf.mxu0
        %v1306 = vadd.f32 %v1283, %v1305
        %1307 = vdwg.mxu0
        %v1308 = vld [vmem:[#allocation8] sm:$0xff]
        %v1309 = vld [vmem:[#allocation8 + $0x8] sm:$0xff]
        %v1310 = vld [vmem:[#allocation8 + $0x10] sm:$0xff]
        %v1311 = vld [vmem:[#allocation8 + $0x18] sm:$0xff]
        %v1312 = vld [vmem:[%s10] sm:$0x1]
        %v1314 = vperm.slane %v1312, 0
        %v1317 = vsel %vm842, %v832, 0
        %1319 = vmatpush.msra.mxu0 0.0
        %1320 = vmatpush.msra.mxu0 0.0
        %1321 = vmatpush.msra.mxu0 0.0
        %1322 = vmatpush.msra.mxu0 0.0
        %1323 = vmatpush.msra.mxu0 0.0
        %1324 = vmatpush.msra.mxu0 0.0
        %1325 = vmatpush.msra.mxu0 0.0
        %1326 = vmatpush.msra.mxu0 0.0
        %1327 = vmatpush.msra.mxu0 0.0
        %1328 = vmatpush.msra.mxu0 0.0
        %1329 = vmatpush.msra.mxu0 0.0
        %1330 = vmatpush.msra.mxu0 0.0
        %1331 = vmatpush.msra.mxu0 %v1311
        %1332 = vmatpush.msra.mxu0 %v1310
        %1333 = vmatpush.msra.mxu0 %v1309
        %1334 = vmatpush.msra.mxu0 %v1308
        %1335 = vmatmul.f32.gmra.mxu0 %v1317
        %v1336 = vpop.f32.mrf.mxu0
        %v1337 = vadd.f32 %v1314, %v1336
        %1338 = vdwg.mxu0
        %v1339 = vld [vmem:[#allocation10] sm:$0xff]
        %v1340 = vld [vmem:[#allocation10 + $0x8] sm:$0xff]
        %v1341 = vld [vmem:[#allocation10 + $0x10] sm:$0xff]
        %v1342 = vld [vmem:[#allocation10 + $0x18] sm:$0xff]
        %v1344 = vsel %vm873, %v1306, 0
        %v1347 = vsel %vm873, %v1337, 0
        %1349 = vmatpush.xpose.msra.mxu0 0.0
        %1350 = vmatpush.xpose.msra.mxu0 0.0
        %1351 = vmatpush.xpose.msra.mxu0 0.0
        %1352 = vmatpush.xpose.msra.mxu0 0.0
        %1353 = vmatpush.xpose.msra.mxu0 0.0
        %1354 = vmatpush.xpose.msra.mxu0 0.0
        %1355 = vmatpush.xpose.msra.mxu0 0.0
        %1356 = vmatpush.xpose.msra.mxu0 0.0
        %1357 = vmatpush.xpose.msra.mxu0 0.0
        %1358 = vmatpush.xpose.msra.mxu0 0.0
        %1359 = vmatpush.xpose.msra.mxu0 0.0
        %1360 = vmatpush.xpose.msra.mxu0 0.0
        %1361 = vmatpush.xpose.msra.mxu0 0.0
        %1362 = vmatpush.xpose.msra.mxu0 0.0
        %1363 = vmatpush.xpose.msra.mxu0 0.0
        %1364 = vmatpush.xpose.msra.mxu0 %v1347
        %1365 = vmatmul.f32.gmra.mxu0 %v1344
        %v1366 = vpop.f32.mrf.mxu0
        %v1367 = vadd.f32 0.0, %v1366
        %1368 = vdwg.mxu0
        %v1369 = vmul.f32 %v1367, 0.35355338
        %v1370 = vsel %vm873, %v1369, -inf
        %1371 = vmax.xlane.f32.xlu0 %v1370
        %v1372 = vpop.xlane.xlu0 %1371
        %v1373 = vsub.f32 %v1369, %v1372
        %v1374 = vmul.f32 %v1373, 1.442695
        %v1375 = vpow.pop %v1374
        %v1376 = vsel %vm873, %v1375, 0.0
        %1377 = vadd.xlane.f32.xlu0 %v1376
        %v1378 = vpop.xlane.xlu0 %1377
        %v1379 = vrcp.pop %v1378
        %v1380 = vmul.f32 %v1375, %v1379
        %1381 = vrot.lane.b32.xlu0 %v1337, 96
        %v1382 = vpop.permute.xlu0 %1381
        %v1385 = vsel %vm873, %v1380, 0
        %1387 = vmatpush.msra.mxu0 0.0
        %1388 = vmatpush.msra.mxu0 0.0
        %1389 = vmatpush.msra.mxu0 0.0
        %1390 = vmatpush.msra.mxu0 0.0
        %1391 = vmatpush.msra.mxu0 0.0
        %1392 = vmatpush.msra.mxu0 0.0
        %1393 = vmatpush.msra.mxu0 0.0
        %1394 = vmatpush.msra.mxu0 0.0
        %1395 = vmatpush.msra.mxu0 0.0
        %1396 = vmatpush.msra.mxu0 0.0
        %1397 = vmatpush.msra.mxu0 0.0
        %1398 = vmatpush.msra.mxu0 0.0
        %1399 = vmatpush.msra.mxu0 0.0
        %1400 = vmatpush.msra.mxu0 0.0
        %1401 = vmatpush.msra.mxu0 0.0
        %1402 = vmatpush.msra.mxu0 %v1382
        %1403 = vmatmul.f32.gmra.mxu0 %v1385
        %v1404 = vpop.f32.mrf.mxu0
        %v1405 = vadd.f32 0.0, %v1404
        %1406 = vdwg.mxu0
        %1407 = vrot.lane.b32.xlu0 %v1306, 120
        %v1408 = vpop.permute.xlu0 %1407
        %1409 = vrot.lane.b32.xlu0 %v1337, 120
        %v1410 = vpop.permute.xlu0 %1409
        %v1411 = vsel %vm873, %v1408, 0
        %v1413 = vsel %vm873, %v1410, 0
        %1415 = vmatpush.xpose.msra.mxu0 0.0
        %1416 = vmatpush.xpose.msra.mxu0 0.0
        %1417 = vmatpush.xpose.msra.mxu0 0.0
        %1418 = vmatpush.xpose.msra.mxu0 0.0
        %1419 = vmatpush.xpose.msra.mxu0 0.0
        %1420 = vmatpush.xpose.msra.mxu0 0.0
        %1421 = vmatpush.xpose.msra.mxu0 0.0
        %1422 = vmatpush.xpose.msra.mxu0 0.0
        %1423 = vmatpush.xpose.msra.mxu0 0.0
        %1424 = vmatpush.xpose.msra.mxu0 0.0
        %1425 = vmatpush.xpose.msra.mxu0 0.0
        %1426 = vmatpush.xpose.msra.mxu0 0.0
        %1427 = vmatpush.xpose.msra.mxu0 0.0
        %1428 = vmatpush.xpose.msra.mxu0 0.0
        %1429 = vmatpush.xpose.msra.mxu0 0.0
        %1430 = vmatpush.xpose.msra.mxu0 %v1413
        %1431 = vmatmul.f32.gmra.mxu0 %v1411
        %v1432 = vpop.f32.mrf.mxu0
        %v1433 = vadd.f32 0.0, %v1432
        %1434 = vdwg.mxu0
        %v1435 = vmul.f32 %v1433, 0.35355338
        %v1436 = vsel %vm873, %v1435, -inf
        %1437 = vmax.xlane.f32.xlu0 %v1436
        %v1438 = vpop.xlane.xlu0 %1437
        %v1439 = vsub.f32 %v1435, %v1438
        %v1440 = vmul.f32 %v1439, 1.442695
        %v1441 = vpow.pop %v1440
        %v1442 = vsel %vm873, %v1441, 0.0
        %1443 = vadd.xlane.f32.xlu0 %v1442
        %v1444 = vpop.xlane.xlu0 %1443
        %v1445 = vrcp.pop %v1444
        %v1446 = vmul.f32 %v1441, %v1445
        %1447 = vrot.lane.b32.xlu0 %v1337, 88
        %v1448 = vpop.permute.xlu0 %1447
        %v1451 = vsel %vm873, %v1446, 0
        %1453 = vmatpush.msra.mxu0 0.0
        %1454 = vmatpush.msra.mxu0 0.0
        %1455 = vmatpush.msra.mxu0 0.0
        %1456 = vmatpush.msra.mxu0 0.0
        %1457 = vmatpush.msra.mxu0 0.0
        %1458 = vmatpush.msra.mxu0 0.0
        %1459 = vmatpush.msra.mxu0 0.0
        %1460 = vmatpush.msra.mxu0 0.0
        %1461 = vmatpush.msra.mxu0 0.0
        %1462 = vmatpush.msra.mxu0 0.0
        %1463 = vmatpush.msra.mxu0 0.0
        %1464 = vmatpush.msra.mxu0 0.0
        %1465 = vmatpush.msra.mxu0 0.0
        %1466 = vmatpush.msra.mxu0 0.0
        %1467 = vmatpush.msra.mxu0 0.0
        %1468 = vmatpush.msra.mxu0 %v1448
        %1469 = vmatmul.f32.gmra.mxu0 %v1451
        %v1470 = vpop.f32.mrf.mxu0
        %v1471 = vadd.f32 0.0, %v1470
        %1472 = vdwg.mxu0
        %v1474 = vsel %vm873, %v1471, 0
        %1476 = vmatpush.msra.mxu0 0.0
        %1477 = vmatpush.msra.mxu0 0.0
        %1478 = vmatpush.msra.mxu0 0.0
        %1479 = vmatpush.msra.mxu0 0.0
        %1480 = vmatpush.msra.mxu0 0.0
        %1481 = vmatpush.msra.mxu0 0.0
        %1482 = vmatpush.msra.mxu0 0.0
        %1483 = vmatpush.msra.mxu0 0.0
        %1484 = vmatpush.msra.mxu0 0.0
        %1485 = vmatpush.msra.mxu0 0.0
        %1486 = vmatpush.msra.mxu0 0.0
        %1487 = vmatpush.msra.mxu0 0.0
        %1488 = vmatpush.msra.mxu0 0.0
        %1489 = vmatpush.msra.mxu0 0.0
        %1490 = vmatpush.msra.mxu0 0.0
        %1491 = vmatpush.msra.mxu0 %v1340
        %1492 = vmatmul.f32.gmra.mxu0 %v1474
        %v1493 = vpop.f32.mrf.mxu0
        %v1494 = vadd.f32 0.0, %v1493
        %1495 = vdwg.mxu0
        %v1497 = vsel %vm873, %v1405, 0
        %1499 = vmatpush.msra.mxu0 0.0
        %1500 = vmatpush.msra.mxu0 0.0
        %1501 = vmatpush.msra.mxu0 0.0
        %1502 = vmatpush.msra.mxu0 0.0
        %1503 = vmatpush.msra.mxu0 0.0
        %1504 = vmatpush.msra.mxu0 0.0
        %1505 = vmatpush.msra.mxu0 0.0
        %1506 = vmatpush.msra.mxu0 0.0
        %1507 = vmatpush.msra.mxu0 0.0
        %1508 = vmatpush.msra.mxu0 0.0
        %1509 = vmatpush.msra.mxu0 0.0
        %1510 = vmatpush.msra.mxu0 0.0
        %1511 = vmatpush.msra.mxu0 0.0
        %1512 = vmatpush.msra.mxu0 0.0
        %1513 = vmatpush.msra.mxu0 0.0
        %1514 = vmatpush.msra.mxu0 %v1339
        %1515 = vmatmul.f32.gmra.mxu0 %v1497
        %v1516 = vpop.f32.mrf.mxu0
        %v1517 = vadd.f32 %v1494, %v1516
        %1518 = vdwg.mxu0
        %1519 = vrot.lane.b32.xlu0 %v1306, 112
        %v1520 = vpop.permute.xlu0 %1519
        %1521 = vrot.lane.b32.xlu0 %v1337, 112
        %v1522 = vpop.permute.xlu0 %1521
        %v1523 = vsel %vm873, %v1520, 0
        %v1525 = vsel %vm873, %v1522, 0
        %1527 = vmatpush.xpose.msra.mxu0 0.0
        %1528 = vmatpush.xpose.msra.mxu0 0.0
        %1529 = vmatpush.xpose.msra.mxu0 0.0
        %1530 = vmatpush.xpose.msra.mxu0 0.0
        %1531 = vmatpush.xpose.msra.mxu0 0.0
        %1532 = vmatpush.xpose.msra.mxu0 0.0
        %1533 = vmatpush.xpose.msra.mxu0 0.0
        %1534 = vmatpush.xpose.msra.mxu0 0.0
        %1535 = vmatpush.xpose.msra.mxu0 0.0
        %1536 = vmatpush.xpose.msra.mxu0 0.0
        %1537 = vmatpush.xpose.msra.mxu0 0.0
        %1538 = vmatpush.xpose.msra.mxu0 0.0
        %1539 = vmatpush.xpose.msra.mxu0 0.0
        %1540 = vmatpush.xpose.msra.mxu0 0.0
        %1541 = vmatpush.xpose.msra.mxu0 0.0
        %1542 = vmatpush.xpose.msra.mxu0 %v1525
        %1543 = vmatmul.f32.gmra.mxu0 %v1523
        %v1544 = vpop.f32.mrf.mxu0
        %v1545 = vadd.f32 0.0, %v1544
        %1546 = vdwg.mxu0
        %v1547 = vmul.f32 %v1545, 0.35355338
        %v1548 = vsel %vm873, %v1547, -inf
        %1549 = vmax.xlane.f32.xlu0 %v1548
        %v1550 = vpop.xlane.xlu0 %1549
        %v1551 = vsub.f32 %v1547, %v1550
        %v1552 = vmul.f32 %v1551, 1.442695
        %v1553 = vpow.pop %v1552
        %v1554 = vsel %vm873, %v1553, 0.0
        %1555 = vadd.xlane.f32.xlu0 %v1554
        %v1556 = vpop.xlane.xlu0 %1555
        %v1557 = vrcp.pop %v1556
        %v1558 = vmul.f32 %v1553, %v1557
        %1559 = vrot.lane.b32.xlu0 %v1337, 80
        %v1560 = vpop.permute.xlu0 %1559
        %v1563 = vsel %vm873, %v1558, 0
        %1565 = vmatpush.msra.mxu0 0.0
        %1566 = vmatpush.msra.mxu0 0.0
        %1567 = vmatpush.msra.mxu0 0.0
        %1568 = vmatpush.msra.mxu0 0.0
        %1569 = vmatpush.msra.mxu0 0.0
        %1570 = vmatpush.msra.mxu0 0.0
        %1571 = vmatpush.msra.mxu0 0.0
        %1572 = vmatpush.msra.mxu0 0.0
        %1573 = vmatpush.msra.mxu0 0.0
        %1574 = vmatpush.msra.mxu0 0.0
        %1575 = vmatpush.msra.mxu0 0.0
        %1576 = vmatpush.msra.mxu0 0.0
        %1577 = vmatpush.msra.mxu0 0.0
        %1578 = vmatpush.msra.mxu0 0.0
        %1579 = vmatpush.msra.mxu0 0.0
        %1580 = vmatpush.msra.mxu0 %v1560
        %1581 = vmatmul.f32.gmra.mxu0 %v1563
        %v1582 = vpop.f32.mrf.mxu0
        %v1583 = vadd.f32 0.0, %v1582
        %1584 = vdwg.mxu0
        %v1586 = vsel %vm873, %v1583, 0
        %1588 = vmatpush.msra.mxu0 0.0
        %1589 = vmatpush.msra.mxu0 0.0
        %1590 = vmatpush.msra.mxu0 0.0
        %1591 = vmatpush.msra.mxu0 0.0
        %1592 = vmatpush.msra.mxu0 0.0
        %1593 = vmatpush.msra.mxu0 0.0
        %1594 = vmatpush.msra.mxu0 0.0
        %1595 = vmatpush.msra.mxu0 0.0
        %1596 = vmatpush.msra.mxu0 0.0
        %1597 = vmatpush.msra.mxu0 0.0
        %1598 = vmatpush.msra.mxu0 0.0
        %1599 = vmatpush.msra.mxu0 0.0
        %1600 = vmatpush.msra.mxu0 0.0
        %1601 = vmatpush.msra.mxu0 0.0
        %1602 = vmatpush.msra.mxu0 0.0
        %1603 = vmatpush.msra.mxu0 %v1341
        %1604 = vmatmul.f32.gmra.mxu0 %v1586
        %v1605 = vpop.f32.mrf.mxu0
        %v1606 = vadd.f32 0.0, %v1605
        %1607 = vdwg.mxu0
        %v1608 = vadd.f32 %v1517, %v1606
        %1609 = vrot.lane.b32.xlu0 %v1306, 104
        %v1610 = vpop.permute.xlu0 %1609
        %1611 = vrot.lane.b32.xlu0 %v1337, 104
        %v1612 = vpop.permute.xlu0 %1611
        %v1613 = vsel %vm873, %v1610, 0
        %v1615 = vsel %vm873, %v1612, 0
        %1617 = vmatpush.xpose.msra.mxu0 0.0
        %1618 = vmatpush.xpose.msra.mxu0 0.0
        %1619 = vmatpush.xpose.msra.mxu0 0.0
        %1620 = vmatpush.xpose.msra.mxu0 0.0
        %1621 = vmatpush.xpose.msra.mxu0 0.0
        %1622 = vmatpush.xpose.msra.mxu0 0.0
        %1623 = vmatpush.xpose.msra.mxu0 0.0
        %1624 = vmatpush.xpose.msra.mxu0 0.0
        %1625 = vmatpush.xpose.msra.mxu0 0.0
        %1626 = vmatpush.xpose.msra.mxu0 0.0
        %1627 = vmatpush.xpose.msra.mxu0 0.0
        %1628 = vmatpush.xpose.msra.mxu0 0.0
        %1629 = vmatpush.xpose.msra.mxu0 0.0
        %1630 = vmatpush.xpose.msra.mxu0 0.0
        %1631 = vmatpush.xpose.msra.mxu0 0.0
        %1632 = vmatpush.xpose.msra.mxu0 %v1615
        %1633 = vmatmul.f32.gmra.mxu0 %v1613
        %v1634 = vpop.f32.mrf.mxu0
        %v1635 = vadd.f32 0.0, %v1634
        %1636 = vdwg.mxu0
        %v1637 = vmul.f32 %v1635, 0.35355338
        %v1638 = vsel %vm873, %v1637, -inf
        %1639 = vmax.xlane.f32.xlu0 %v1638
        %v1640 = vpop.xlane.xlu0 %1639
        %v1641 = vsub.f32 %v1637, %v1640
        %v1642 = vmul.f32 %v1641, 1.442695
        %v1643 = vpow.pop %v1642
        %v1644 = vsel %vm873, %v1643, 0.0
        %1645 = vadd.xlane.f32.xlu0 %v1644
        %v1646 = vpop.xlane.xlu0 %1645
        %v1647 = vrcp.pop %v1646
        %v1648 = vmul.f32 %v1643, %v1647
        %1649 = vrot.lane.b32.xlu0 %v1337, 72
        %v1650 = vpop.permute.xlu0 %1649
        %v1653 = vsel %vm873, %v1648, 0
        %1655 = vmatpush.msra.mxu0 0.0
        %1656 = vmatpush.msra.mxu0 0.0
        %1657 = vmatpush.msra.mxu0 0.0
        %1658 = vmatpush.msra.mxu0 0.0
        %1659 = vmatpush.msra.mxu0 0.0
        %1660 = vmatpush.msra.mxu0 0.0
        %1661 = vmatpush.msra.mxu0 0.0
        %1662 = vmatpush.msra.mxu0 0.0
        %1663 = vmatpush.msra.mxu0 0.0
        %1664 = vmatpush.msra.mxu0 0.0
        %1665 = vmatpush.msra.mxu0 0.0
        %1666 = vmatpush.msra.mxu0 0.0
        %1667 = vmatpush.msra.mxu0 0.0
        %1668 = vmatpush.msra.mxu0 0.0
        %1669 = vmatpush.msra.mxu0 0.0
        %1670 = vmatpush.msra.mxu0 %v1650
        %1671 = vmatmul.f32.gmra.mxu0 %v1653
        %v1672 = vpop.f32.mrf.mxu0
        %v1673 = vadd.f32 0.0, %v1672
        %1674 = vdwg.mxu0
        %v1676 = vsel %vm873, %v1673, 0
        %1678 = vmatpush.msra.mxu0 0.0
        %1679 = vmatpush.msra.mxu0 0.0
        %1680 = vmatpush.msra.mxu0 0.0
        %1681 = vmatpush.msra.mxu0 0.0
        %1682 = vmatpush.msra.mxu0 0.0
        %1683 = vmatpush.msra.mxu0 0.0
        %1684 = vmatpush.msra.mxu0 0.0
        %1685 = vmatpush.msra.mxu0 0.0
        %1686 = vmatpush.msra.mxu0 0.0
        %1687 = vmatpush.msra.mxu0 0.0
        %1688 = vmatpush.msra.mxu0 0.0
        %1689 = vmatpush.msra.mxu0 0.0
        %1690 = vmatpush.msra.mxu0 0.0
        %1691 = vmatpush.msra.mxu0 0.0
        %1692 = vmatpush.msra.mxu0 0.0
        %1693 = vmatpush.msra.mxu0 %v1342
        %1694 = vmatmul.f32.gmra.mxu0 %v1676
        %v1695 = vpop.f32.mrf.mxu0
        %v1696 = vadd.f32 0.0, %v1695
        %1697 = vdwg.mxu0
        %v1698 = vadd.f32 %v1608, %v1696
        %v1699 = vld [vmem:[%s12] sm:$0x1]
        %v1701 = vperm.slane %v1699, 0
        %v1703 = vadd.f32 %v1698, %v1701
        %v1704 = vadd.f32 %v1276, %v1703
        %v1705 = vld [vmem:[%s19] sm:$0x1]
        %v1706 = vld [vmem:[%s20] sm:$0x1]
        %v1707 = vsel %vm842, %v1704, 0.0
        %1708 = vadd.xlane.f32.xlu0 %v1707
        %v1709 = vpop.xlane.xlu0 %1708
        %v1710 = vmul.f32 %v1709, %v1249
        %v1711 = vsub.f32 %v1704, %v1710
        %v1712 = vmul.f32 %v1711, %v1711
        %v1713 = vsel %vm842, %v1712, 0.0
        %1714 = vadd.xlane.f32.xlu0 %v1713
        %v1715 = vpop.xlane.xlu0 %1714
        %v1716 = vmul.f32 %v1715, %v1249
        %v1717 = vadd.f32 %v1716, 1e-05
        %v1718 = vrsqrt.pop %v1717
        %v1719 = vmul.f32 %v1718, %v1717
        %v1720 = vmul.f32 %v1719, %v1718
        %v1721 = vmul.f32 0.5, %v1720
        %v1722 = vsub.f32 1.5, %v1721
        %v1723 = vmul.f32 %v1718, %v1722
        %vm1724 = vweird.f32 %v1717
        %vm1725 = vweird.f32 %v1718
        %vm1726 = vmor %vm1724, %vm1725
        %v1727 = vsel %vm1726, %v1718, %v1723
        %v1728 = vmul.f32 %v1711, %v1727
        %v1730 = vperm.slane %v1705, 0
        %v1732 = vmul.f32 %v1728, %v1730
        %v1734 = vperm.slane %v1706, 0
        %v1736 = vadd.f32 %v1732, %v1734
        %v1737 = vld [vmem:[#allocation11] sm:$0xff]
        %v1738 = vld [vmem:[#allocation11 + $0x8] sm:$0xff]
        %v1739 = vld [vmem:[#allocation11 + $0x10] sm:$0xff]
        %v1740 = vld [vmem:[#allocation11 + $0x18] sm:$0xff]
        %v1741 = vld [vmem:[%s14] sm:$0x1]
        %v1743 = vperm.slane %v1741, 0
        %v1746 = vsel %vm842, %v1736, 0
        %1748 = vmatpush.msra.mxu0 0.0
        %1749 = vmatpush.msra.mxu0 0.0
        %1750 = vmatpush.msra.mxu0 0.0
        %1751 = vmatpush.msra.mxu0 0.0
        %1752 = vmatpush.msra.mxu0 0.0
        %1753 = vmatpush.msra.mxu0 0.0
        %1754 = vmatpush.msra.mxu0 0.0
        %1755 = vmatpush.msra.mxu0 0.0
        %1756 = vmatpush.msra.mxu0 0.0
        %1757 = vmatpush.msra.mxu0 0.0
        %1758 = vmatpush.msra.mxu0 0.0
        %1759 = vmatpush.msra.mxu0 0.0
        %1760 = vmatpush.msra.mxu0 %v1740
        %1761 = vmatpush.msra.mxu0 %v1739
        %1762 = vmatpush.msra.mxu0 %v1738
        %1763 = vmatpush.msra.mxu0 %v1737
        %1764 = vmatmul.f32.gmra.mxu0 %v1746
        %v1765 = vpop.f32.mrf.mxu0
        %v1766 = vadd.f32 %v1743, %v1765
        %1767 = vdwg.mxu0
        %v1768 = vmul.f32 %v1766, 0.5
        %v1769 = vmul.f32 %v1766, 0.70710677
        %v1770 = vmul.f32 %v1769, %v1769
        %v1771 = vmin.f32 16.0, %v1770
        %v1772 = vmul.f32 %v1771, 2.1237322e-06
        %v1773 = vadd.f32 %v1772, 0.00028619796
        %v1774 = vmul.f32 %v1771, %v1773
        %v1775 = vadd.f32 %v1774, 0.0036580483
        %v1776 = vmul.f32 %v1771, %v1775
        %v1777 = vadd.f32 %v1776, 0.05243302
        %v1778 = vmul.f32 %v1771, %v1777
        %v1779 = vadd.f32 %v1778, 0.18741608
        %v1780 = vmul.f32 %v1771, %v1779
        %v1781 = vadd.f32 %v1780, 1.1283791
        %v1782 = vmul.f32 %v1769, %v1781
        %v1783 = vmul.f32 %v1771, 3.8918573e-05
        %v1784 = vadd.f32 %v1783, 0.001143296
        %v1785 = vmul.f32 %v1771, %v1784
        %v1786 = vadd.f32 %v1785, 0.014752088
        %v1787 = vmul.f32 %v1771, %v1786
        %v1788 = vadd.f32 %v1787, 0.112945676
        %v1789 = vmul.f32 %v1771, %v1788
        %v1790 = vadd.f32 %v1789, 0.4994258
        %v1791 = vmul.f32 %v1771, %v1790
        %v1792 = vadd.f32 %v1791, 1.0
        %v1793 = vrcp.pop %v1792
        %v1794 = vmul.f32 %v1792, %v1793
        %v1795 = vsub.f32 1.0, %v1794
        %v1796 = vmul.f32 %v1793, %v1795
        %v1797 = vadd.f32 %v1793, %v1796
        %vm1798 = vweird.f32 %v1792
        %vm1799 = vweird.f32 %v1793
        %vm1800 = vmor %vm1798, %vm1799
        %v1801 = vsel %vm1800, %v1793, %v1797
        %v1802 = vand.u32 2147483647, %v1792
        %vm1803 = vcmp.eq.f32.partialorder %v1802, 8.507059e+37
        %v1804 = vand.u32 %v1792, 2147483648
        %v1805 = vor.u32 1.1754944e-38, %v1804
        %v1806 = vsel %vm1803, %v1805, %v1801
        %v1807 = vmul.f32 %v1782, %v1806
        %v1808 = vmin.f32 %v1807, 1.0
        %v1809 = vmax.f32 %v1808, -1.0
        %v1810 = vadd.f32 %v1809, 1.0
        %v1811 = vmul.f32 %v1768, %v1810
        %v1812 = vld [vmem:[%s15] sm:$0xff]
        %v1813 = vld [vmem:[%s15 + $0x8] sm:$0xff]
        %v1814 = vld [vmem:[%s15 + $0x10] sm:$0xff]
        %v1815 = vld [vmem:[%s15 + $0x18] sm:$0xff]
        %v1816 = vld [vmem:[%s15 + $0x20] sm:$0xff]
        %v1817 = vld [vmem:[%s15 + $0x28] sm:$0xff]
        %v1818 = vld [vmem:[%s15 + $0x30] sm:$0xff]
        %v1819 = vld [vmem:[%s15 + $0x38] sm:$0xff]
        %v1820 = vld [vmem:[%s16] sm:$0x1]
        %v1822 = vperm.slane %v1820, 0
        %vm1824 = vcmask 523264
        %v1826 = vsel %vm1824, %v1811, 0
        %1828 = vmatpush.msra.mxu0 0.0
        %1829 = vmatpush.msra.mxu0 0.0
        %1830 = vmatpush.msra.mxu0 0.0
        %1831 = vmatpush.msra.mxu0 0.0
        %1832 = vmatpush.msra.mxu0 0.0
        %1833 = vmatpush.msra.mxu0 0.0
        %1834 = vmatpush.msra.mxu0 0.0
        %1835 = vmatpush.msra.mxu0 0.0
        %1836 = vmatpush.msra.mxu0 %v1819
        %1837 = vmatpush.msra.mxu0 %v1818
        %1838 = vmatpush.msra.mxu0 %v1817
        %1839 = vmatpush.msra.mxu0 %v1816
        %1840 = vmatpush.msra.mxu0 %v1815
        %1841 = vmatpush.msra.mxu0 %v1814
        %1842 = vmatpush.msra.mxu0 %v1813
        %1843 = vmatpush.msra.mxu0 %v1812
        %1844 = vmatmul.f32.gmra.mxu0 %v1826
        %v1845 = vpop.f32.mrf.mxu0
        %v1846 = vadd.f32 %v1822, %v1845
        %1847 = vdwg.mxu0
        %v1848 = vadd.f32 %v1736, %v1846
        %v1849 = vld [vmem:[%s21] sm:$0x1]
        %v1850 = vld [vmem:[%s22] sm:$0x1]
        %v1851 = vsel %vm842, %v1848, 0.0
        %1852 = vadd.xlane.f32.xlu0 %v1851
        %v1853 = vpop.xlane.xlu0 %1852
        %v1854 = vmul.f32 %v1853, %v1249
        %v1855 = vsub.f32 %v1848, %v1854
        %v1856 = vmul.f32 %v1855, %v1855
        %v1857 = vsel %vm842, %v1856, 0.0
        %1858 = vadd.xlane.f32.xlu0 %v1857
        %v1859 = vpop.xlane.xlu0 %1858
        %v1860 = vmul.f32 %v1859, %v1249
        %v1861 = vadd.f32 %v1860, 1e-05
        %v1862 = vrsqrt.pop %v1861
        %v1863 = vmul.f32 %v1862, %v1861
        %v1864 = vmul.f32 %v1863, %v1862
        %v1865 = vmul.f32 0.5, %v1864
        %v1866 = vsub.f32 1.5, %v1865
        %v1867 = vmul.f32 %v1862, %v1866
        %vm1868 = vweird.f32 %v1861
        %vm1869 = vweird.f32 %v1862
        %vm1870 = vmor %vm1868, %vm1869
        %v1871 = vsel %vm1870, %v1862, %v1867
        %v1872 = vmul.f32 %v1855, %v1871
        %v1874 = vperm.slane %v1849, 0
        %v1876 = vmul.f32 %v1872, %v1874
        %v1878 = vperm.slane %v1850, 0
        %v1880 = vadd.f32 %v1876, %v1878
        %1881 = vst.msk [vmem:[%s830] sm:$0xff] %vm842, %v1880
        %s1882 = sand.u32 %s546, 1
        %s1883 = scalar_lea.sflag [#allocation4], %s1882
        %s1884 = sand.u32 %s546, 1
        %s1885 = smul.addr %s1884, 8
        %s1886 = scalar_lea.vmem [#allocation13], %s1885
        // Predicated region
        $region137: #{tpu_custom_call.1} parent=111 // pred_check
          %p1887 = pneg %p556
        $region138: #{tpu_custom_call.1} parent=111 // pred_check_branch
          %1889 = sbr.rel (%p1887) target = $region140
        $region139: #{tpu_custom_call.1} parent=111 // pred_region
          %1891 = vsyncadd %s1883, 0
          %s1892 = smul.addr %s45, 8
          %s1893 = scalar_lea.hbm %s23, %s1892
          %s1895 = sshll.u32 %s1886, 4
          %s1896 = int_to_ptr.vmem [resolvable:$true] %s1895
          %s1897 = sshll.u32 %s1893, 4
          %s1898 = int_to_ptr.hbm [resolvable:$true] %s1897
          %1900 = dma.vmem_to_hbm [thread:$0]  %s1896, 128, %s1898, %s1883
        $region140: #{tpu_custom_call.1} parent=111 // pred_fallthru
          _
      $region112: #{tpu_custom_call.1} parent=5 // pred_fallthru
        _
      %p1901 = scmp.le.s32.totalorder 2, %s40
      // Predicated region
      $region141: #{tpu_custom_call.1} parent=5 // pred_check
        %p1902 = pneg %p1901
      $region142: #{tpu_custom_call.1} parent=5 // pred_check_branch
        %1904 = sbr.rel (%p1902) target = $region144
      $region143: #{tpu_custom_call.1} parent=5 // pred_region
        %s1905 = ssub.s32 %s40, 2
        // Predicated region
        $region145: #{tpu_custom_call.1} parent=143 // pred_check
          %p1906 = pneg %p562
        $region146: #{tpu_custom_call.1} parent=143 // pred_check_branch
          %1908 = sbr.rel (%p1906) target = $region148
        $region147: #{tpu_custom_call.1} parent=143 // pred_region
          %s1909 = sand.u32 %s547, 1
          %s1910 = scalar_lea.sflag [#allocation4], %s1909
          %s1911 = sand.u32 %s547, 1
          %s1912 = smul.addr %s1911, 8
          %s1913 = scalar_lea.vmem [#allocation13], %s1912
          %1915 = dma.done %s1910, 128
        $region148: #{tpu_custom_call.1} parent=143 // pred_fallthru
          _
      $region144: #{tpu_custom_call.1} parent=5 // pred_fallthru
        _
    $region6: #{tpu_custom_call.1} parent=1 // loop_footer
      %s44 = sadd.s32 1, %s40
    $region7: #{tpu_custom_call.1} parent=1 // loop_footer_branch
      %39 = sbr.rel target = $region3
    $region8: #{tpu_custom_call.1} parent=1 // loop_exit
      _
    %1916 = vsyncpa [#allocation3], 1
    %s1917 = scalar_lea.sflag [#allocation3], 1
    %1918 = vsyncpa %s1917, 1
    %1919 = vsyncpa [#allocation6], 1
    %s1920 = scalar_lea.sflag [#allocation6], 1
    %1921 = vsyncpa %s1920, 1
    %1922 = vsyncpa [#allocation9], 1
    %1923 = vsyncpa [#allocation12], 1
    %1924 = vsyncpa [#allocation4], 1
    %s1925 = scalar_lea.sflag [#allocation4], 1
    %1926 = vsyncpa %s1925, 1

</llo_original>
